<compile_context>
chip_gen: v6e
topology: v6e:2x2x1
jax: 0.10.0
libtpu: 0.0.40
codegen_flags: <defaults>
</compile_context>

<pallas_src>
import jax
import jax.numpy as jnp
from jax.experimental import pallas as pl
from jax.experimental.pallas import tpu as pltpu

EPS = 1e-5
_VMEM_LIMIT = 32 * 1024 * 1024  # stay portable down to v7x's 64 MiB VMEM


# ---------------------------------------------------------------------------
# Weight preparation glue (runs once in XLA): banded Toeplitz matrices.
#   t[dh, w_in*Ci + ci, w_out*Co + co] = W[dh, w_in - w_out + 1, ci, co]
# so conv(x)[h] = sum_dh xpad_row[h + dh] @ t[dh]   (xpad = H-padded rows).
# ---------------------------------------------------------------------------
def _band_weights(w_hwio, width):
    kh, kw, ci, co = w_hwio.shape
    w_in = jnp.arange(width)[:, None]
    w_out = jnp.arange(width)[None, :]
    dw = w_in - w_out + (kw // 2)                     # (W, W)
    valid = (dw >= 0) & (dw < kw)
    dw_c = jnp.clip(dw, 0, kw - 1)
    t = w_hwio[:, dw_c, :, :]                         # (kh, W_in, W_out, ci, co)
    t = jnp.where(valid[None, :, :, None, None], t, 0.0)
    t = jnp.transpose(t, (0, 1, 3, 2, 4))             # (kh, W_in, ci, W_out, co)
    return t.reshape(kh, width * ci, width * co)


def _fold_bn(stats, gamma, beta, count, width, co):
    """stats: (2, W*Co) accumulated [sum; sumsq] per (w, co) lane -> (2, W*Co)
    fused scale/bias, tiled over w to match the lane layout."""
    s = stats[0].reshape(width, co).sum(axis=0)
    ss = stats[1].reshape(width, co).sum(axis=0)
    mean = s / count
    var = jnp.maximum(ss / count - mean * mean, 0.0)   # biased var (PyTorch train)
    scale = gamma.astype(jnp.float32) * jax.lax.rsqrt(var + EPS)
    bias = beta.astype(jnp.float32) - mean * scale
    return jnp.stack([jnp.tile(scale, width), jnp.tile(bias, width)], axis=0)


# ---------------------------------------------------------------------------
# Kernel A: conv1 (3 banded matmuls, bf16 operands) + partial BN1 stats.
# ---------------------------------------------------------------------------
def _conv1_stats_kernel(x_ref, t_ref, y_ref, stats_ref):
    # x_ref: (H+2, W*Ci) f32 (one image, H-padded rows); t_ref: (3, W*Ci, W*Co) bf16
    # y_ref: (H, W*Co) f32 raw conv output; stats_ref: (2, W*Co) f32 accumulator
    h = y_ref.shape[0]
    acc = jnp.dot(x_ref[0:h, :].astype(jnp.bfloat16), t_ref[0],
                  preferred_element_type=jnp.float32)
    acc += jnp.dot(x_ref[1:h + 1, :].astype(jnp.bfloat16), t_ref[1],
                   preferred_element_type=jnp.float32)
    acc += jnp.dot(x_ref[2:h + 2, :].astype(jnp.bfloat16), t_ref[2],
                   preferred_element_type=jnp.float32)
    y_ref[...] = acc

    @pl.when(pl.program_id(0) == 0)
    def _():
        stats_ref[...] = jnp.zeros_like(stats_ref)

    stats_ref[0:1, :] += jnp.sum(acc, axis=0, keepdims=True)
    stats_ref[1:2, :] += jnp.sum(acc * acc, axis=0, keepdims=True)


# ---------------------------------------------------------------------------
# Kernel B: fused BN1+ReLU (single FMA pass) + conv2 + partial BN2 stats.
# ---------------------------------------------------------------------------
def _bn1_conv2_stats_kernel(y1_ref, sb1_ref, t2_ref, y2_ref, stats_ref, yp_ref):
    # y1_ref: (H, W*Co) f32 raw conv1; sb1_ref: (2, W*Co) f32 [scale; bias]
    # t2_ref: (3, W*Co, W*Co) bf16; y2_ref: (H, W*Co) f32; stats_ref: (2, W*Co)
    # yp_ref: VMEM scratch (H+2, W*Co) f32, rows 0 and H+1 are the zero halo.
    h, wco = y1_ref.shape

    @pl.when(pl.program_id(0) == 0)
    def _():
        # zero only the 1-row halo, once (scratch persists across grid steps)
        yp_ref[0:1, :] = jnp.zeros((1, wco), jnp.float32)
        yp_ref[h + 1:h + 2, :] = jnp.zeros((1, wco), jnp.float32)
        stats_ref[...] = jnp.zeros_like(stats_ref)

    y1n = jnp.maximum(y1_ref[...] * sb1_ref[0:1, :] + sb1_ref[1:2, :], 0.0)
    yp_ref[1:h + 1, :] = y1n

    acc = jnp.dot(yp_ref[0:h, :].astype(jnp.bfloat16), t2_ref[0],
                  preferred_element_type=jnp.float32)
    acc += jnp.dot(yp_ref[1:h + 1, :].astype(jnp.bfloat16), t2_ref[1],
                   preferred_element_type=jnp.float32)
    acc += jnp.dot(yp_ref[2:h + 2, :].astype(jnp.bfloat16), t2_ref[2],
                   preferred_element_type=jnp.float32)
    y2_ref[...] = acc

    stats_ref[0:1, :] += jnp.sum(acc, axis=0, keepdims=True)
    stats_ref[1:2, :] += jnp.sum(acc * acc, axis=0, keepdims=True)


# ---------------------------------------------------------------------------
# Kernel C: fused BN2 + ReLU (single lane-dense FMA pass).
# ---------------------------------------------------------------------------
def _bn2_relu_kernel(y2_ref, sb2_ref, out_ref):
    out_ref[...] = jnp.maximum(
        y2_ref[...] * sb2_ref[0:1, :] + sb2_ref[1:2, :], 0.0)


# ---------------------------------------------------------------------------
# Wrapper
# ---------------------------------------------------------------------------
@jax.jit
def double_conv(x_nchw, w1_oihw, gamma1, beta1, w2_oihw, gamma2, beta2):
    """x_nchw: (N, Cin, H, W). Returns (N, Cout, H, W), matching PyTorch."""
    n, ci, h, w = x_nchw.shape
    co = w1_oihw.shape[0]
    wci, wco = w * ci, w * co
    count = float(n * h * w)

    # layout glue: NCHW -> (N, H, W*Ci) row slabs, H-padded by 1 row each side
    x_rows = jnp.transpose(x_nchw, (0, 2, 3, 1)).reshape(n, h, wci)
    x_pad = jnp.pad(x_rows.astype(jnp.float32), ((0, 0), (1, 1), (0, 0)))

    # banded-Toeplitz weights (bf16 MXU operands)
    t1 = _band_weights(jnp.transpose(w1_oihw, (2, 3, 1, 0)).astype(jnp.float32),
                       w).astype(jnp.bfloat16)                   # (3, W*Ci, W*Co)
    t2 = _band_weights(jnp.transpose(w2_oihw, (2, 3, 1, 0)).astype(jnp.float32),
                       w).astype(jnp.bfloat16)                   # (3, W*Co, W*Co)

    # --- pass 1: conv1 + BN1 partial sums (grid over images, reduction axis) ---
    y1_raw, stats1 = pl.pallas_call(
        _conv1_stats_kernel,
        grid=(n,),
        in_specs=[
            pl.BlockSpec((None, h + 2, wci), lambda i: (i, 0, 0)),
            pl.BlockSpec((3, wci, wco), lambda i: (0, 0, 0)),
        ],
        out_specs=[
            pl.BlockSpec((None, h, wco), lambda i: (i, 0, 0)),
            pl.BlockSpec((2, wco), lambda i: (0, 0)),
        ],
        out_shape=[
            jax.ShapeDtypeStruct((n, h, wco), jnp.float32),
            jax.ShapeDtypeStruct((2, wco), jnp.float32),
        ],
        compiler_params=pltpu.CompilerParams(
            dimension_semantics=("arbitrary",),
            vmem_limit_bytes=_VMEM_LIMIT),
    )(x_pad, t1)

    sb1 = _fold_bn(stats1, gamma1, beta1, count, w, co)           # (2, W*Co)

    # --- pass 2: BN1+ReLU (fused FMA) + conv2 + BN2 partial sums ---
    y2_raw, stats2 = pl.pallas_call(
        _bn1_conv2_stats_kernel,
        grid=(n,),
        in_specs=[
            pl.BlockSpec((None, h, wco), lambda i: (i, 0, 0)),
            pl.BlockSpec((2, wco), lambda i: (0, 0)),
            pl.BlockSpec((3, wco, wco), lambda i: (0, 0, 0)),
        ],
        out_specs=[
            pl.BlockSpec((None, h, wco), lambda i: (i, 0, 0)),
            pl.BlockSpec((2, wco), lambda i: (0, 0)),
        ],
        out_shape=[
            jax.ShapeDtypeStruct((n, h, wco), jnp.float32),
            jax.ShapeDtypeStruct((2, wco), jnp.float32),
        ],
        scratch_shapes=[pltpu.VMEM((h + 2, wco), jnp.float32)],
        compiler_params=pltpu.CompilerParams(
            dimension_semantics=("arbitrary",),
            vmem_limit_bytes=_VMEM_LIMIT),
    )(y1_raw, sb1, t2)

    sb2 = _fold_bn(stats2, gamma2, beta2, count, w, co)

    # --- pass 3: BN2 + ReLU (lane-dense elementwise) ---
    out_rows = pl.pallas_call(
        _bn2_relu_kernel,
        grid=(n,),
        in_specs=[
            pl.BlockSpec((None, h, wco), lambda i: (i, 0, 0)),
            pl.BlockSpec((2, wco), lambda i: (0, 0)),
        ],
        out_specs=pl.BlockSpec((None, h, wco), lambda i: (i, 0, 0)),
        out_shape=jax.ShapeDtypeStruct((n, h, wco), jnp.float32),
        compiler_params=pltpu.CompilerParams(
            dimension_semantics=("parallel",),
            vmem_limit_bytes=_VMEM_LIMIT),
    )(y2_raw, sb2)

    # layout glue back to NCHW
    return jnp.transpose(out_rows.reshape(n, h, w, co), (0, 3, 1, 2))


# ---------------------------------------------------------------------------
# Pure-JAX reference mirroring the PyTorch module (training-mode BN, f32)
# ---------------------------------------------------------------------------
def _reference(x, w1, g1, b1, w2, g2, b2):
    def conv(x, w):
        return jax.lax.conv_general_dilated(
            x, w, window_strides=(1, 1), padding=((1, 1), (1, 1)),
            dimension_numbers=("NCHW", "OIHW", "NCHW"))

    def bn_relu(y, g, b):
        mean = y.mean(axis=(0, 2, 3), keepdims=True)
        var = ((y - mean) ** 2).mean(axis=(0, 2, 3), keepdims=True)
        yn = (y - mean) / jnp.sqrt(var + EPS)
        yn = yn * g.reshape(1, -1, 1, 1) + b.reshape(1, -1, 1, 1)
        return jnp.maximum(yn, 0.0)

    y = bn_relu(conv(x, w1), g1, b1)
    return bn_relu(conv(y, w2), g2, b2)


if __name__ == "__main__":
    N, Cin, Cout, H, W = 2, 4, 8, 16, 16

    key = jax.random.PRNGKey(0)
    kx, kw1, kw2, kg1, kb1, kg2, kb2 = jax.random.split(key, 7)

    x = jax.random.normal(kx, (N, Cin, H, W), dtype=jnp.float32)
    w1 = jax.random.normal(kw1, (Cout, Cin, 3, 3), dtype=jnp.float32) * 0.1
    w2 = jax.random.normal(kw2, (Cout, Cout, 3, 3), dtype=jnp.float32) * 0.1
    gamma1 = 1.0 + 0.1 * jax.random.normal(kg1, (Cout,), dtype=jnp.float32)
    beta1 = 0.1 * jax.random.normal(kb1, (Cout,), dtype=jnp.float32)
    gamma2 = 1.0 + 0.1 * jax.random.normal(kg2, (Cout,), dtype=jnp.float32)
    beta2 = 0.1 * jax.random.normal(kb2, (Cout,), dtype=jnp.float32)

    out = jax.block_until_ready(
        double_conv(x, w1, gamma1, beta1, w2, gamma2, beta2))
    ref = _reference(x, w1, gamma1, beta1, w2, gamma2, beta2)

    assert out.shape == (N, Cout, H, W)
    max_err = float(jnp.max(jnp.abs(out - ref)))
    # bf16 MXU operands (f32 accumulation) => ~1e-2-level abs error vs f32 ref.
    assert max_err < 8e-2, f"max abs err too large: {max_err}"

    print("KERNEL_OK")
</pallas_src>

<mosaic_0001>
module attributes {stable_mosaic.version = 11 : i64} {
  func.func @_conv1_stats_kernel(%arg0: i32, %arg1: memref<1x18x64xf32, #tpu.memory_space<vmem>>, %arg2: memref<3x64x128xbf16, #tpu.memory_space<vmem>>, %arg3: memref<1x16x128xf32, #tpu.memory_space<vmem>>, %arg4: memref<2x128xf32, #tpu.memory_space<vmem>>) attributes {dimension_semantics = [#tpu.dimension_semantics<arbitrary>], iteration_bounds = array<i64: 2>, scalar_prefetch = 0 : i64, scratch_operands = 0 : i64, tpu.core_type = #tpu.core_type<tc>, window_params = [{transform_indices = @transform_0, window_bounds = array<i64: 1, 18, 64>}, {pipeline_mode = #tpu.pipeline_mode<synchronous>, transform_indices = @transform_1, window_bounds = array<i64: 3, 64, 128>}, {transform_indices = @transform_2, window_bounds = array<i64: 1, 16, 128>}, {pipeline_mode = #tpu.pipeline_mode<synchronous>, transform_indices = @transform_3, window_bounds = array<i64: 2, 128>}]} {
    %c0 = arith.constant 0 : index
    %c0_0 = arith.constant 0 : index
    %c0_1 = arith.constant 0 : index
    %0 = vector.load %arg1[%c0, %c0_0, %c0_1] : memref<1x18x64xf32, #tpu.memory_space<vmem>>, vector<1x16x64xf32>
    %1 = vector.shape_cast %0 : vector<1x16x64xf32> to vector<16x64xf32>
    %2 = arith.truncf %1 : vector<16x64xf32> to vector<16x64xbf16>
    %c0_2 = arith.constant 0 : index
    %c0_3 = arith.constant 0 : index
    %c0_4 = arith.constant 0 : index
    %3 = vector.load %arg2[%c0_2, %c0_3, %c0_4] : memref<3x64x128xbf16, #tpu.memory_space<vmem>>, vector<1x64x128xbf16>
    %4 = vector.shape_cast %3 : vector<1x64x128xbf16> to vector<64x128xbf16>
    %cst = arith.constant dense<0.000000e+00> : vector<16x128xf32>
    %5 = tpu.matmul %2, %4, %cst {dimension_numbers = #tpu.dot_dimension_numbers<[1], [0], [0], [1], [0, 0, 1, 1], [], []>} : vector<16x64xbf16>, vector<64x128xbf16>, vector<16x128xf32> -> vector<16x128xf32>
    %c0_5 = arith.constant 0 : index
    %c1 = arith.constant 1 : index
    %c0_6 = arith.constant 0 : index
    %6 = vector.load %arg1[%c0_5, %c1, %c0_6] : memref<1x18x64xf32, #tpu.memory_space<vmem>>, vector<1x16x64xf32>
    %7 = vector.shape_cast %6 : vector<1x16x64xf32> to vector<16x64xf32>
    %8 = arith.truncf %7 : vector<16x64xf32> to vector<16x64xbf16>
    %c1_7 = arith.constant 1 : index
    %c0_8 = arith.constant 0 : index
    %c0_9 = arith.constant 0 : index
    %9 = vector.load %arg2[%c1_7, %c0_8, %c0_9] : memref<3x64x128xbf16, #tpu.memory_space<vmem>>, vector<1x64x128xbf16>
    %10 = vector.shape_cast %9 : vector<1x64x128xbf16> to vector<64x128xbf16>
    %cst_10 = arith.constant dense<0.000000e+00> : vector<16x128xf32>
    %11 = tpu.matmul %8, %10, %cst_10 {dimension_numbers = #tpu.dot_dimension_numbers<[1], [0], [0], [1], [0, 0, 1, 1], [], []>} : vector<16x64xbf16>, vector<64x128xbf16>, vector<16x128xf32> -> vector<16x128xf32>
    %12 = arith.addf %5, %11 : vector<16x128xf32>
    %c0_11 = arith.constant 0 : index
    %c2 = arith.constant 2 : index
    %c0_12 = arith.constant 0 : index
    %13 = vector.load %arg1[%c0_11, %c2, %c0_12] : memref<1x18x64xf32, #tpu.memory_space<vmem>>, vector<1x16x64xf32>
    %14 = vector.shape_cast %13 : vector<1x16x64xf32> to vector<16x64xf32>
    %15 = arith.truncf %14 : vector<16x64xf32> to vector<16x64xbf16>
    %c2_13 = arith.constant 2 : index
    %c0_14 = arith.constant 0 : index
    %c0_15 = arith.constant 0 : index
    %16 = vector.load %arg2[%c2_13, %c0_14, %c0_15] : memref<3x64x128xbf16, #tpu.memory_space<vmem>>, vector<1x64x128xbf16>
    %17 = vector.shape_cast %16 : vector<1x64x128xbf16> to vector<64x128xbf16>
    %cst_16 = arith.constant dense<0.000000e+00> : vector<16x128xf32>
    %18 = tpu.matmul %15, %17, %cst_16 {dimension_numbers = #tpu.dot_dimension_numbers<[1], [0], [0], [1], [0, 0, 1, 1], [], []>} : vector<16x64xbf16>, vector<64x128xbf16>, vector<16x128xf32> -> vector<16x128xf32>
    %19 = arith.addf %12, %18 : vector<16x128xf32>
    %c0_17 = arith.constant 0 : index
    %c0_18 = arith.constant 0 : index
    %c0_19 = arith.constant 0 : index
    %20 = vector.load %arg3[%c0_17, %c0_18, %c0_19] : memref<1x16x128xf32, #tpu.memory_space<vmem>>, vector<1x16x128xf32>
    %21 = vector.shape_cast %20 : vector<1x16x128xf32> to vector<16x128xf32>
    %22 = vector.shape_cast %19 : vector<16x128xf32> to vector<1x16x128xf32>
    tpu.vector_store %arg3[%c0_17, %c0_18, %c0_19], %22 {strides = array<i32>} : memref<1x16x128xf32, #tpu.memory_space<vmem>>, vector<1x16x128xf32>,
    %c0_i32 = arith.constant 0 : i32
    %23 = arith.cmpi eq, %arg0, %c0_i32 : i32
    %24 = arith.extui %23 : i1 to i32
    %c0_i32_20 = arith.constant 0 : i32
    %25 = arith.cmpi ne, %24, %c0_i32_20 : i32
    scf.if %25 {
      %cst_31 = arith.constant 0.000000e+00 : f32
      %37 = vector.broadcast %cst_31 : f32 to vector<2x128xf32>
      %c0_32 = arith.constant 0 : index
      %c0_33 = arith.constant 0 : index
      %38 = vector.load %arg4[%c0_32, %c0_33] : memref<2x128xf32, #tpu.memory_space<vmem>>, vector<2x128xf32>
      tpu.vector_store %arg4[%c0_32, %c0_33], %37 {strides = array<i32>} : memref<2x128xf32, #tpu.memory_space<vmem>>, vector<2x128xf32>,
    } else {
    }
    %c0_21 = arith.constant 0 : index
    %c0_22 = arith.constant 0 : index
    %26 = vector.load %arg4[%c0_21, %c0_22] : memref<2x128xf32, #tpu.memory_space<vmem>>, vector<1x128xf32>
    %cst_23 = arith.constant dense<0.000000e+00> : vector<128xf32>
    %27 = vector.multi_reduction <add>, %19, %cst_23 [0] : vector<16x128xf32> to vector<128xf32>
    %28 = vector.shape_cast %27 : vector<128xf32> to vector<1x128xf32>
    %29 = arith.addf %26, %28 : vector<1x128xf32>
    %c0_24 = arith.constant 0 : index
    %c0_25 = arith.constant 0 : index
    %30 = vector.load %arg4[%c0_24, %c0_25] : memref<2x128xf32, #tpu.memory_space<vmem>>, vector<1x128xf32>
    tpu.vector_store %arg4[%c0_24, %c0_25], %29 {strides = array<i32>} : memref<2x128xf32, #tpu.memory_space<vmem>>, vector<1x128xf32>,
    %c1_26 = arith.constant 1 : index
    %c0_27 = arith.constant 0 : index
    %31 = vector.load %arg4[%c1_26, %c0_27] : memref<2x128xf32, #tpu.memory_space<vmem>>, vector<1x128xf32>
    %32 = arith.mulf %19, %19 : vector<16x128xf32>
    %cst_28 = arith.constant dense<0.000000e+00> : vector<128xf32>
    %33 = vector.multi_reduction <add>, %32, %cst_28 [0] : vector<16x128xf32> to vector<128xf32>
    %34 = vector.shape_cast %33 : vector<128xf32> to vector<1x128xf32>
    %35 = arith.addf %31, %34 : vector<1x128xf32>
    %c1_29 = arith.constant 1 : index
    %c0_30 = arith.constant 0 : index
    %36 = vector.load %arg4[%c1_29, %c0_30] : memref<2x128xf32, #tpu.memory_space<vmem>>, vector<1x128xf32>
    tpu.vector_store %arg4[%c1_29, %c0_30], %35 {strides = array<i32>} : memref<2x128xf32, #tpu.memory_space<vmem>>, vector<1x128xf32>,
    return
  }
  func.func @transform_0(%arg0: i32) -> (i32, i32, i32) {
    %c0_i32 = arith.constant 0 : i32
    %c0_i32_0 = arith.constant 0 : i32
    %c0_i32_1 = arith.constant 0 : i32
    return %arg0, %c0_i32, %c0_i32_0 : i32, i32, i32
  }
  func.func @transform_1(%arg0: i32) -> (i32, i32, i32) {
    %c0_i32 = arith.constant 0 : i32
    %c0_i32_0 = arith.constant 0 : i32
    %c0_i32_1 = arith.constant 0 : i32
    %c0_i32_2 = arith.constant 0 : i32
    return %c0_i32, %c0_i32_0, %c0_i32_1 : i32, i32, i32
  }
  func.func @transform_2(%arg0: i32) -> (i32, i32, i32) {
    %c0_i32 = arith.constant 0 : i32
    %c0_i32_0 = arith.constant 0 : i32
    %c0_i32_1 = arith.constant 0 : i32
    return %arg0, %c0_i32, %c0_i32_0 : i32, i32, i32
  }
  func.func @transform_3(%arg0: i32) -> (i32, i32) {
    %c0_i32 = arith.constant 0 : i32
    %c0_i32_0 = arith.constant 0 : i32
    %c0_i32_1 = arith.constant 0 : i32
    return %c0_i32, %c0_i32_0 : i32, i32
  }
}

module attributes {stable_mosaic.version = 11 : i64} {
  func.func @_bn1_conv2_stats_kernel(%arg0: i32, %arg1: memref<1x16x128xf32, #tpu.memory_space<vmem>>, %arg2: memref<2x128xf32, #tpu.memory_space<vmem>>, %arg3: memref<3x128x128xbf16, #tpu.memory_space<vmem>>, %arg4: memref<1x16x128xf32, #tpu.memory_space<vmem>>, %arg5: memref<2x128xf32, #tpu.memory_space<vmem>>, %arg6: memref<18x128xf32, #tpu.memory_space<vmem>>) attributes {dimension_semantics = [#tpu.dimension_semantics<arbitrary>], iteration_bounds = array<i64: 2>, scalar_prefetch = 0 : i64, scratch_operands = 1 : i64, tpu.core_type = #tpu.core_type<tc>, window_params = [{transform_indices = @transform_0, window_bounds = array<i64: 1, 16, 128>}, {pipeline_mode = #tpu.pipeline_mode<synchronous>, transform_indices = @transform_1, window_bounds = array<i64: 2, 128>}, {pipeline_mode = #tpu.pipeline_mode<synchronous>, transform_indices = @transform_2, window_bounds = array<i64: 3, 128, 128>}, {transform_indices = @transform_3, window_bounds = array<i64: 1, 16, 128>}, {pipeline_mode = #tpu.pipeline_mode<synchronous>, transform_indices = @transform_4, window_bounds = array<i64: 2, 128>}]} {
    %c0_i32 = arith.constant 0 : i32
    %0 = arith.cmpi eq, %arg0, %c0_i32 : i32
    %1 = arith.extui %0 : i1 to i32
    %c0_i32_0 = arith.constant 0 : i32
    %2 = arith.cmpi ne, %1, %c0_i32_0 : i32
    scf.if %2 {
      %cst_38 = arith.constant 0.000000e+00 : f32
      %45 = vector.broadcast %cst_38 : f32 to vector<1x128xf32>
      %c0_39 = arith.constant 0 : index
      %c0_40 = arith.constant 0 : index
      %46 = vector.load %arg6[%c0_39, %c0_40] : memref<18x128xf32, #tpu.memory_space<vmem>>, vector<1x128xf32>
      tpu.vector_store %arg6[%c0_39, %c0_40], %45 {strides = array<i32>} : memref<18x128xf32, #tpu.memory_space<vmem>>, vector<1x128xf32>,
      %cst_41 = arith.constant 0.000000e+00 : f32
      %47 = vector.broadcast %cst_41 : f32 to vector<1x128xf32>
      %c17 = arith.constant 17 : index
      %c0_42 = arith.constant 0 : index
      %48 = vector.load %arg6[%c17, %c0_42] : memref<18x128xf32, #tpu.memory_space<vmem>>, vector<1x128xf32>
      tpu.vector_store %arg6[%c17, %c0_42], %47 {strides = array<i32>} : memref<18x128xf32, #tpu.memory_space<vmem>>, vector<1x128xf32>,
      %cst_43 = arith.constant 0.000000e+00 : f32
      %49 = vector.broadcast %cst_43 : f32 to vector<2x128xf32>
      %c0_44 = arith.constant 0 : index
      %c0_45 = arith.constant 0 : index
      %50 = vector.load %arg5[%c0_44, %c0_45] : memref<2x128xf32, #tpu.memory_space<vmem>>, vector<2x128xf32>
      tpu.vector_store %arg5[%c0_44, %c0_45], %49 {strides = array<i32>} : memref<2x128xf32, #tpu.memory_space<vmem>>, vector<2x128xf32>,
    } else {
    }
    %c0 = arith.constant 0 : index
    %c0_1 = arith.constant 0 : index
    %c0_2 = arith.constant 0 : index
    %3 = vector.load %arg1[%c0, %c0_1, %c0_2] : memref<1x16x128xf32, #tpu.memory_space<vmem>>, vector<1x16x128xf32>
    %4 = vector.shape_cast %3 : vector<1x16x128xf32> to vector<16x128xf32>
    %c0_3 = arith.constant 0 : index
    %c0_4 = arith.constant 0 : index
    %5 = vector.load %arg2[%c0_3, %c0_4] : memref<2x128xf32, #tpu.memory_space<vmem>>, vector<1x128xf32>
    %6 = vector.broadcast %5 : vector<1x128xf32> to vector<16x128xf32>
    %7 = arith.mulf %4, %6 : vector<16x128xf32>
    %c1 = arith.constant 1 : index
    %c0_5 = arith.constant 0 : index
    %8 = vector.load %arg2[%c1, %c0_5] : memref<2x128xf32, #tpu.memory_space<vmem>>, vector<1x128xf32>
    %9 = vector.broadcast %8 : vector<1x128xf32> to vector<16x128xf32>
    %10 = arith.addf %7, %9 : vector<16x128xf32>
    %cst = arith.constant 0.000000e+00 : f32
    %11 = vector.broadcast %cst : f32 to vector<16x128xf32>
    %12 = arith.maximumf %10, %11 : vector<16x128xf32>
    %c1_6 = arith.constant 1 : index
    %c0_7 = arith.constant 0 : index
    %13 = vector.load %arg6[%c1_6, %c0_7] : memref<18x128xf32, #tpu.memory_space<vmem>>, vector<16x128xf32>
    tpu.vector_store %arg6[%c1_6, %c0_7], %12 {strides = array<i32>} : memref<18x128xf32, #tpu.memory_space<vmem>>, vector<16x128xf32>,
    %c0_8 = arith.constant 0 : index
    %c0_9 = arith.constant 0 : index
    %14 = vector.load %arg6[%c0_8, %c0_9] : memref<18x128xf32, #tpu.memory_space<vmem>>, vector<16x128xf32>
    %15 = arith.truncf %14 : vector<16x128xf32> to vector<16x128xbf16>
    %c0_10 = arith.constant 0 : index
    %c0_11 = arith.constant 0 : index
    %c0_12 = arith.constant 0 : index
    %16 = vector.load %arg3[%c0_10, %c0_11, %c0_12] : memref<3x128x128xbf16, #tpu.memory_space<vmem>>, vector<1x128x128xbf16>
    %17 = vector.shape_cast %16 : vector<1x128x128xbf16> to vector<128x128xbf16>
    %cst_13 = arith.constant dense<0.000000e+00> : vector<16x128xf32>
    %18 = tpu.matmul %15, %17, %cst_13 {dimension_numbers = #tpu.dot_dimension_numbers<[1], [0], [0], [1], [0, 0, 1, 1], [], []>} : vector<16x128xbf16>, vector<128x128xbf16>, vector<16x128xf32> -> vector<16x128xf32>
    %c1_14 = arith.constant 1 : index
    %c0_15 = arith.constant 0 : index
    %19 = vector.load %arg6[%c1_14, %c0_15] : memref<18x128xf32, #tpu.memory_space<vmem>>, vector<16x128xf32>
    %20 = arith.truncf %19 : vector<16x128xf32> to vector<16x128xbf16>
    %c1_16 = arith.constant 1 : index
    %c0_17 = arith.constant 0 : index
    %c0_18 = arith.constant 0 : index
    %21 = vector.load %arg3[%c1_16, %c0_17, %c0_18] : memref<3x128x128xbf16, #tpu.memory_space<vmem>>, vector<1x128x128xbf16>
    %22 = vector.shape_cast %21 : vector<1x128x128xbf16> to vector<128x128xbf16>
    %cst_19 = arith.constant dense<0.000000e+00> : vector<16x128xf32>
    %23 = tpu.matmul %20, %22, %cst_19 {dimension_numbers = #tpu.dot_dimension_numbers<[1], [0], [0], [1], [0, 0, 1, 1], [], []>} : vector<16x128xbf16>, vector<128x128xbf16>, vector<16x128xf32> -> vector<16x128xf32>
    %24 = arith.addf %18, %23 : vector<16x128xf32>
    %c2 = arith.constant 2 : index
    %c0_20 = arith.constant 0 : index
    %25 = vector.load %arg6[%c2, %c0_20] : memref<18x128xf32, #tpu.memory_space<vmem>>, vector<16x128xf32>
    %26 = arith.truncf %25 : vector<16x128xf32> to vector<16x128xbf16>
    %c2_21 = arith.constant 2 : index
    %c0_22 = arith.constant 0 : index
    %c0_23 = arith.constant 0 : index
    %27 = vector.load %arg3[%c2_21, %c0_22, %c0_23] : memref<3x128x128xbf16, #tpu.memory_space<vmem>>, vector<1x128x128xbf16>
    %28 = vector.shape_cast %27 : vector<1x128x128xbf16> to vector<128x128xbf16>
    %cst_24 = arith.constant dense<0.000000e+00> : vector<16x128xf32>
    %29 = tpu.matmul %26, %28, %cst_24 {dimension_numbers = #tpu.dot_dimension_numbers<[1], [0], [0], [1], [0, 0, 1, 1], [], []>} : vector<16x128xbf16>, vector<128x128xbf16>, vector<16x128xf32> -> vector<16x128xf32>
    %30 = arith.addf %24, %29 : vector<16x128xf32>
    %c0_25 = arith.constant 0 : index
    %c0_26 = arith.constant 0 : index
    %c0_27 = arith.constant 0 : index
    %31 = vector.load %arg4[%c0_25, %c0_26, %c0_27] : memref<1x16x128xf32, #tpu.memory_space<vmem>>, vector<1x16x128xf32>
    %32 = vector.shape_cast %31 : vector<1x16x128xf32> to vector<16x128xf32>
    %33 = vector.shape_cast %30 : vector<16x128xf32> to vector<1x16x128xf32>
    tpu.vector_store %arg4[%c0_25, %c0_26, %c0_27], %33 {strides = array<i32>} : memref<1x16x128xf32, #tpu.memory_space<vmem>>, vector<1x16x128xf32>,
    %c0_28 = arith.constant 0 : index
    %c0_29 = arith.constant 0 : index
    %34 = vector.load %arg5[%c0_28, %c0_29] : memref<2x128xf32, #tpu.memory_space<vmem>>, vector<1x128xf32>
    %cst_30 = arith.constant dense<0.000000e+00> : vector<128xf32>
    %35 = vector.multi_reduction <add>, %30, %cst_30 [0] : vector<16x128xf32> to vector<128xf32>
    %36 = vector.shape_cast %35 : vector<128xf32> to vector<1x128xf32>
    %37 = arith.addf %34, %36 : vector<1x128xf32>
    %c0_31 = arith.constant 0 : index
    %c0_32 = arith.constant 0 : index
    %38 = vector.load %arg5[%c0_31, %c0_32] : memref<2x128xf32, #tpu.memory_space<vmem>>, vector<1x128xf32>
    tpu.vector_store %arg5[%c0_31, %c0_32], %37 {strides = array<i32>} : memref<2x128xf32, #tpu.memory_space<vmem>>, vector<1x128xf32>,
    %c1_33 = arith.constant 1 : index
    %c0_34 = arith.constant 0 : index
    %39 = vector.load %arg5[%c1_33, %c0_34] : memref<2x128xf32, #tpu.memory_space<vmem>>, vector<1x128xf32>
    %40 = arith.mulf %30, %30 : vector<16x128xf32>
    %cst_35 = arith.constant dense<0.000000e+00> : vector<128xf32>
    %41 = vector.multi_reduction <add>, %40, %cst_35 [0] : vector<16x128xf32> to vector<128xf32>
    %42 = vector.shape_cast %41 : vector<128xf32> to vector<1x128xf32>
    %43 = arith.addf %39, %42 : vector<1x128xf32>
    %c1_36 = arith.constant 1 : index
    %c0_37 = arith.constant 0 : index
    %44 = vector.load %arg5[%c1_36, %c0_37] : memref<2x128xf32, #tpu.memory_space<vmem>>, vector<1x128xf32>
    tpu.vector_store %arg5[%c1_36, %c0_37], %43 {strides = array<i32>} : memref<2x128xf32, #tpu.memory_space<vmem>>, vector<1x128xf32>,
    return
  }
  func.func @transform_0(%arg0: i32) -> (i32, i32, i32) {
    %c0_i32 = arith.constant 0 : i32
    %c0_i32_0 = arith.constant 0 : i32
    %c0_i32_1 = arith.constant 0 : i32
    return %arg0, %c0_i32, %c0_i32_0 : i32, i32, i32
  }
  func.func @transform_1(%arg0: i32) -> (i32, i32) {
    %c0_i32 = arith.constant 0 : i32
    %c0_i32_0 = arith.constant 0 : i32
    %c0_i32_1 = arith.constant 0 : i32
    return %c0_i32, %c0_i32_0 : i32, i32
  }
  func.func @transform_2(%arg0: i32) -> (i32, i32, i32) {
    %c0_i32 = arith.constant 0 : i32
    %c0_i32_0 = arith.constant 0 : i32
    %c0_i32_1 = arith.constant 0 : i32
    %c0_i32_2 = arith.constant 0 : i32
    return %c0_i32, %c0_i32_0, %c0_i32_1 : i32, i32, i32
  }
  func.func @transform_3(%arg0: i32) -> (i32, i32, i32) {
    %c0_i32 = arith.constant 0 : i32
    %c0_i32_0 = arith.constant 0 : i32
    %c0_i32_1 = arith.constant 0 : i32
    return %arg0, %c0_i32, %c0_i32_0 : i32, i32, i32
  }
  func.func @transform_4(%arg0: i32) -> (i32, i32) {
    %c0_i32 = arith.constant 0 : i32
    %c0_i32_0 = arith.constant 0 : i32
    %c0_i32_1 = arith.constant 0 : i32
    return %c0_i32, %c0_i32_0 : i32, i32
  }
}

module attributes {stable_mosaic.version = 11 : i64} {
  func.func @_bn2_relu_kernel(%arg0: i32, %arg1: memref<1x16x128xf32, #tpu.memory_space<vmem>>, %arg2: memref<2x128xf32, #tpu.memory_space<vmem>>, %arg3: memref<1x16x128xf32, #tpu.memory_space<vmem>>) attributes {dimension_semantics = [#tpu.dimension_semantics<parallel>], iteration_bounds = array<i64: 2>, scalar_prefetch = 0 : i64, scratch_operands = 0 : i64, tpu.core_type = #tpu.core_type<tc>, window_params = [{transform_indices = @transform_0, window_bounds = array<i64: 1, 16, 128>}, {pipeline_mode = #tpu.pipeline_mode<synchronous>, transform_indices = @transform_1, window_bounds = array<i64: 2, 128>}, {transform_indices = @transform_2, window_bounds = array<i64: 1, 16, 128>}]} {
    %c0 = arith.constant 0 : index
    %c0_0 = arith.constant 0 : index
    %c0_1 = arith.constant 0 : index
    %0 = vector.load %arg1[%c0, %c0_0, %c0_1] : memref<1x16x128xf32, #tpu.memory_space<vmem>>, vector<1x16x128xf32>
    %1 = vector.shape_cast %0 : vector<1x16x128xf32> to vector<16x128xf32>
    %c0_2 = arith.constant 0 : index
    %c0_3 = arith.constant 0 : index
    %2 = vector.load %arg2[%c0_2, %c0_3] : memref<2x128xf32, #tpu.memory_space<vmem>>, vector<1x128xf32>
    %3 = vector.broadcast %2 : vector<1x128xf32> to vector<16x128xf32>
    %4 = arith.mulf %1, %3 : vector<16x128xf32>
    %c1 = arith.constant 1 : index
    %c0_4 = arith.constant 0 : index
    %5 = vector.load %arg2[%c1, %c0_4] : memref<2x128xf32, #tpu.memory_space<vmem>>, vector<1x128xf32>
    %6 = vector.broadcast %5 : vector<1x128xf32> to vector<16x128xf32>
    %7 = arith.addf %4, %6 : vector<16x128xf32>
    %cst = arith.constant 0.000000e+00 : f32
    %8 = vector.broadcast %cst : f32 to vector<16x128xf32>
    %9 = arith.maximumf %7, %8 : vector<16x128xf32>
    %c0_5 = arith.constant 0 : index
    %c0_6 = arith.constant 0 : index
    %c0_7 = arith.constant 0 : index
    %10 = vector.load %arg3[%c0_5, %c0_6, %c0_7] : memref<1x16x128xf32, #tpu.memory_space<vmem>>, vector<1x16x128xf32>
    %11 = vector.shape_cast %10 : vector<1x16x128xf32> to vector<16x128xf32>
    %12 = vector.shape_cast %9 : vector<16x128xf32> to vector<1x16x128xf32>
    tpu.vector_store %arg3[%c0_5, %c0_6, %c0_7], %12 {strides = array<i32>} : memref<1x16x128xf32, #tpu.memory_space<vmem>>, vector<1x16x128xf32>,
    return
  }
  func.func @transform_0(%arg0: i32) -> (i32, i32, i32) {
    %c0_i32 = arith.constant 0 : i32
    %c0_i32_0 = arith.constant 0 : i32
    %c0_i32_1 = arith.constant 0 : i32
    return %arg0, %c0_i32, %c0_i32_0 : i32, i32, i32
  }
  func.func @transform_1(%arg0: i32) -> (i32, i32) {
    %c0_i32 = arith.constant 0 : i32
    %c0_i32_0 = arith.constant 0 : i32
    %c0_i32_1 = arith.constant 0 : i32
    return %c0_i32, %c0_i32_0 : i32, i32
  }
  func.func @transform_2(%arg0: i32) -> (i32, i32, i32) {
    %c0_i32 = arith.constant 0 : i32
    %c0_i32_0 = arith.constant 0 : i32
    %c0_i32_1 = arith.constant 0 : i32
    return %arg0, %c0_i32, %c0_i32_0 : i32, i32, i32
  }
}

</mosaic_0001>

<llo_original>
// kernel: double_conv.3
$region0: #{double_conv.3}
  #allocation0 [shape = 'u32[]', space=smem, size = 0x4, offset = 0x4, fixed_abs, tag = 'smem constant byte address 0x4 - core index']
  #allocation1 [shape = 'u32[144,128]{1,0:T(1,128)}', space=vmem, size = 0x12000, scoped, tag = 'internal scratch']
  %s0 = inlined_call_operand.vmem [shape: f32[2,18,64], index: 0, kind: input, shape index: {}]
  %s1 = inlined_call_operand.vmem [shape: bf16[3,64,128], index: 1, kind: input, shape index: {}]
  %s2 = inlined_call_operand.vmem [shape: f32[2,16,128], index: 2, kind: output, shape index: {0}]
  %s3 = inlined_call_operand.vmem [shape: f32[2,128], index: 3, kind: output, shape index: {1}]
  %4 = xla_tuple %s2, %s3
  %s5 = sld [smem:[#allocation0]]
  $region53: #{double_conv.3} parent=0
    _
  %s7 = ssub.s32 1, %s5
  %s8 = scalar_select 0, %s7, %s5
  loop: start=0, step=1, limit=4
  $region2: #{double_conv.3} parent=0 // loop_pre_header
    _
  $region3: #{double_conv.3} parent=0 // loop_header
    %s10 = sphi 0, %s14
    %p11 = scmp.ge.s32.totalorder %s10, 4
    %s20 = sphi 0, %s22
    %s23 = sphi 0, %s20
    %s24 = sphi 0, %s23
    %s40 = sphi 0, %s24
    %s44 = sphi 0, %s44
    %s46 = sphi 0, %s44
    %s47 = sphi 0, %s46
    %s61 = sphi 0, %s47
    %s67 = sphi 0, %s69
    %s70 = sphi 0, %s67
    %s71 = sphi 0, %s70
    %s87 = sphi 0, %s71
    %s91 = sphi 0, %s91
    %s93 = sphi 0, %s91
    %s94 = sphi 0, %s93
    %s108 = sphi 0, %s94
  $region4: #{double_conv.3} parent=0 // loop_header_branch
    %13 = sbr.rel (%p11) target = $region8
  $region5: #{double_conv.3} parent=0 // loop_body
    %s15 = ssub.s32 %s10, 1
    %s16 = ssub.s32 %s10, 2
    %s17 = sadd.s32 %s10, 1
    %s18 = ssub.s32 %s10, %s17
    %p19 = scmp.eq.s32.totalorder %s18, 0
    %s21 = sadd.s32 %s20, 1
    %s22 = scalar_select %p19, %s20, %s21
    %p25 = pneg %p19
    %p26 = scmp.eq.s32.totalorder %s10, 1
    %p27 = por %p25, %p26
    %p28 = scmp.ne.s32.totalorder %s20, %s23
    %p29 = scmp.eq.s32.totalorder %s10, 0
    %p30 = por %p28, %p29
    %p31 = scmp.ne.s32.totalorder %s20, %s23
    %p32 = scmp.eq.s32.totalorder %s15, 1
    %p33 = por %p31, %p32
    %p34 = scmp.ne.s32.totalorder %s23, %s24
    %p35 = scmp.eq.s32.totalorder %s15, 0
    %p36 = por %p34, %p35
    %p37 = scmp.ne.s32.totalorder %s23, %s24
    %p38 = scmp.eq.s32.totalorder %s16, 1
    %p39 = por %p37, %p38
    %p41 = scmp.ne.s32.totalorder %s24, %s40
    %p42 = scmp.eq.s32.totalorder %s16, 0
    %p43 = por %p41, %p42
    %s45 = sadd.s32 %s44, 1
    %p48 = scmp.eq.s32.totalorder %s10, 1
    %p49 = scmp.ne.s32.totalorder %s44, %s46
    %p50 = scmp.eq.s32.totalorder %s10, 0
    %p51 = por %p49, %p50
    %p52 = scmp.ne.s32.totalorder %s44, %s46
    %p53 = scmp.eq.s32.totalorder %s15, 1
    %p54 = por %p52, %p53
    %p55 = scmp.ne.s32.totalorder %s46, %s47
    %p56 = scmp.eq.s32.totalorder %s15, 0
    %p57 = por %p55, %p56
    %p58 = scmp.ne.s32.totalorder %s46, %s47
    %p59 = scmp.eq.s32.totalorder %s16, 1
    %p60 = por %p58, %p59
    %p62 = scmp.ne.s32.totalorder %s47, %s61
    %p63 = scmp.eq.s32.totalorder %s16, 0
    %p64 = por %p62, %p63
    %s65 = ssub.s32 %s10, %s17
    %p66 = scmp.eq.s32.totalorder %s65, 0
    %s68 = sadd.s32 %s67, 1
    %s69 = scalar_select %p66, %s67, %s68
    %p72 = pneg %p66
    %p73 = scmp.eq.s32.totalorder %s10, 1
    %p74 = por %p72, %p73
    %p75 = scmp.ne.s32.totalorder %s67, %s70
    %p76 = scmp.eq.s32.totalorder %s10, 0
    %p77 = por %p75, %p76
    %p78 = scmp.ne.s32.totalorder %s67, %s70
    %p79 = scmp.eq.s32.totalorder %s15, 1
    %p80 = por %p78, %p79
    %p81 = scmp.ne.s32.totalorder %s70, %s71
    %p82 = scmp.eq.s32.totalorder %s15, 0
    %p83 = por %p81, %p82
    %p84 = scmp.ne.s32.totalorder %s70, %s71
    %p85 = scmp.eq.s32.totalorder %s16, 1
    %p86 = por %p84, %p85
    %p88 = scmp.ne.s32.totalorder %s71, %s87
    %p89 = scmp.eq.s32.totalorder %s16, 0
    %p90 = por %p88, %p89
    %s92 = sadd.s32 %s91, 1
    %p95 = scmp.eq.s32.totalorder %s10, 1
    %p96 = scmp.ne.s32.totalorder %s91, %s93
    %p97 = scmp.eq.s32.totalorder %s10, 0
    %p98 = por %p96, %p97
    %p99 = scmp.ne.s32.totalorder %s91, %s93
    %p100 = scmp.eq.s32.totalorder %s15, 1
    %p101 = por %p99, %p100
    %p102 = scmp.ne.s32.totalorder %s93, %s94
    %p103 = scmp.eq.s32.totalorder %s15, 0
    %p104 = por %p102, %p103
    %p105 = scmp.ne.s32.totalorder %s93, %s94
    %p106 = scmp.eq.s32.totalorder %s16, 1
    %p107 = por %p105, %p106
    %p109 = scmp.ne.s32.totalorder %s94, %s108
    %p110 = scmp.eq.s32.totalorder %s16, 0
    %p111 = por %p109, %p110
    %p112 = scmp.le.s32.totalorder 1, %s10
    %p113 = scmp.lt.s32.totalorder %s10, 3
    %p114 = pnand %p112, %p113
    %p115 = pneg %p114
    // Predicated region
    $region9: #{double_conv.3} parent=5 // pred_check
      _
    $region10: #{double_conv.3} parent=5 // pred_check_branch
      %117 = sbr.rel (%p114) target = $region12
    $region11: #{double_conv.3} parent=5 // pred_region
      %s118 = ssub.s32 %s10, 1
      // Predicated region
      $region13: #{double_conv.3} parent=11 // pred_check
        %p119 = pneg %p57
      $region14: #{double_conv.3} parent=11 // pred_check_branch
        %121 = sbr.rel (%p119) target = $region16
      $region15: #{double_conv.3} parent=11 // pred_region
        _
      $region16: #{double_conv.3} parent=11 // pred_fallthru
        _
    $region12: #{double_conv.3} parent=5 // pred_fallthru
      _
    %p122 = scmp.lt.s32.totalorder %s10, 2
    // Predicated region
    $region17: #{double_conv.3} parent=5 // pred_check
      %p123 = pneg %p122
    $region18: #{double_conv.3} parent=5 // pred_check_branch
      %125 = sbr.rel (%p123) target = $region20
    $region19: #{double_conv.3} parent=5 // pred_region
      // Predicated region
      $region21: #{double_conv.3} parent=19 // pred_check
        %p126 = pneg %p30
      $region22: #{double_conv.3} parent=19 // pred_check_branch
        %128 = sbr.rel (%p126) target = $region24
      $region23: #{double_conv.3} parent=19 // pred_region
        %p129 = scmp.lt.s32.totalorder %s10, 1
        %s130 = scalar_select %p129, %s10, 1
        %s131 = smul.addr %s130, 3
        %s132 = smul.addr %s131, 8
        %s133 = scalar_lea.vmem %s0, %s132
      $region24: #{double_conv.3} parent=19 // pred_fallthru
        _
    $region20: #{double_conv.3} parent=5 // pred_fallthru
      _
    %p134 = scmp.le.s32.totalorder 1, %s10
    %p135 = scmp.lt.s32.totalorder %s10, 3
    %p136 = pnand %p134, %p135
    %p137 = pneg %p136
    // Predicated region
    $region25: #{double_conv.3} parent=5 // pred_check
      _
    $region26: #{double_conv.3} parent=5 // pred_check_branch
      %139 = sbr.rel (%p136) target = $region28
    $region27: #{double_conv.3} parent=5 // pred_region
      %s140 = ssub.s32 %s10, 1
      %p141 = scmp.lt.s32.totalorder %s15, 1
      %s142 = scalar_select %p141, %s15, 1
      %s143 = smul.addr %s142, 3
      %s144 = smul.addr %s143, 8
      %s145 = scalar_lea.vmem %s0, %s144
      %p146 = pneg %p36
      %p147 = pneg %p33
      %p148 = pneg %p57
      %p149 = pneg %p54
      %p150 = pneg %p83
      %p151 = pneg %p80
      %p152 = scmp.lt.s32.totalorder %s15, 1
      %s153 = scalar_select %p152, %s15, 1
      %s154 = smul.addr %s153, 2
      %s155 = smul.addr %s154, 8
      %s156 = scalar_lea.vmem %s2, %s155
      %p157 = pneg %p104
      %p158 = pneg %p101
      %p159 = scmp.lt.s32.totalorder %s15, 1
      %s160 = scalar_select %p159, %s15, 1
      %s161 = smul.addr %s160, 3
      %s162 = smul.addr %s161, 8
      %s163 = scalar_lea.vmem %s0, %s162
      %p164 = scmp.lt.s32.totalorder %s15, 1
      %s165 = scalar_select %p164, %s15, 1
      %s166 = smul.addr %s165, 2
      %s167 = smul.addr %s166, 8
      %s168 = scalar_lea.vmem %s2, %s167
      %v170 = vld [vmem:[%s163] sm:$0xff]
      %v171 = vld [vmem:[%s163 + $0x8] sm:$0xff]
      %v172 = vpack.c.bf16 %v171, %v170
      %v173 = vld [vmem:[%s1] sm:$0xf]
      %v174 = vld [vmem:[%s1 + $0x4] sm:$0xf]
      %v175 = vld [vmem:[%s1 + $0x8] sm:$0xf]
      %v176 = vld [vmem:[%s1 + $0xc] sm:$0xf]
      %v177 = vld [vmem:[%s1 + $0x10] sm:$0xf]
      %v178 = vld [vmem:[%s1 + $0x14] sm:$0xf]
      %v179 = vld [vmem:[%s1 + $0x18] sm:$0xf]
      %v180 = vld [vmem:[%s1 + $0x1c] sm:$0xf]
      %v181 = vld [vmem:[%s163 + $0x1] sm:$0xff]
      %v182 = vld [vmem:[%s163 + $0x9] sm:$0xff]
      %v183 = vpack.c.bf16 %v182, %v181
      %s184 = scalar_lea.vmem %s1, 32
      %v185 = vld [vmem:[%s184] sm:$0xf]
      %v186 = vld [vmem:[%s184 + $0x4] sm:$0xf]
      %v187 = vld [vmem:[%s184 + $0x8] sm:$0xf]
      %v188 = vld [vmem:[%s184 + $0xc] sm:$0xf]
      %v189 = vld [vmem:[%s184 + $0x10] sm:$0xf]
      %v190 = vld [vmem:[%s184 + $0x14] sm:$0xf]
      %v191 = vld [vmem:[%s184 + $0x18] sm:$0xf]
      %v192 = vld [vmem:[%s184 + $0x1c] sm:$0xf]
      %v201 = vunpack.c.l.b16 %v185
      %v202 = vunpack.c.l.b16 %v186
      %v203 = vunpack.c.l.b16 %v187
      %v204 = vunpack.c.l.b16 %v188
      %v205 = vunpack.c.l.b16 %v189
      %v206 = vunpack.c.l.b16 %v190
      %v207 = vunpack.c.l.b16 %v191
      %v208 = vunpack.c.l.b16 %v192
      %v209 = vpack.c.b16 %v202, %v201
      %v210 = vpack.c.b16 %v204, %v203
      %v211 = vpack.c.b16 %v206, %v205
      %v212 = vpack.c.b16 %v208, %v207
      %vm217 = vcmask 523264
      %v219 = vsel %vm217, %v183, 0
      %221 = vmatprep.subr.bf16.mxu0 0
      %222 = vmatpush1.bf16.msra.mxu0 0
      %223 = vmatprep.subr.bf16.mxu0 0
      %224 = vmatpush1.bf16.msra.mxu0 0
      %225 = vmatprep.subr.bf16.mxu0 0
      %226 = vmatpush1.bf16.msra.mxu0 0
      %227 = vmatprep.subr.bf16.mxu0 0
      %228 = vmatpush1.bf16.msra.mxu0 0
      %229 = vmatprep.subr.bf16.mxu0 0
      %230 = vmatpush1.bf16.msra.mxu0 %v212
      %231 = vmatprep.subr.bf16.mxu0 0
      %232 = vmatpush1.bf16.msra.mxu0 %v211
      %233 = vmatprep.subr.bf16.mxu0 0
      %234 = vmatpush1.bf16.msra.mxu0 %v210
      %235 = vmatprep.subr.bf16.mxu0 0
      %236 = vmatpush1.bf16.msra.mxu0 %v209
      %237 = vmatprep.subr.bf16.mxu0 0
      %238 = vmatpush2.bf16.msra.mxu0 0
      %239 = vmatprep.subr.bf16.mxu0 0
      %240 = vmatpush2.bf16.msra.mxu0 0
      %241 = vmatprep.subr.bf16.mxu0 0
      %242 = vmatpush2.bf16.msra.mxu0 0
      %243 = vmatprep.subr.bf16.mxu0 0
      %244 = vmatpush2.bf16.msra.mxu0 0
      %245 = vmatprep.subr.bf16.mxu0 0
      %246 = vmatpush2.bf16.msra.mxu0 0
      %247 = vmatprep.subr.bf16.mxu0 0
      %248 = vmatpush2.bf16.msra.mxu0 0
      %249 = vmatprep.subr.bf16.mxu0 0
      %250 = vmatpush2.bf16.msra.mxu0 0
      %251 = vmatprep.subr.bf16.mxu0 0
      %252 = vmatpush2.bf16.msra.mxu0 0
      %253 = vmatprep.mubr.bf16.mxu0 0
      %254 = vmatmul.mubr.bf16.gmra.mxu0 %v219
      %v255 = vpop.f32.mrf.mxu0
      %v256 = vadd.f32 0.0, %v255
      %v257 = vpop.f32.mrf.mxu0
      %v258 = vpop.f32.mrf.mxu0
      %v259 = vadd.f32 0.0, %v258
      %v260 = vpop.f32.mrf.mxu0
      %261 = vdwg.mxu0
      %v270 = vunpack.c.l.b16 %v173
      %v271 = vunpack.c.l.b16 %v174
      %v272 = vunpack.c.l.b16 %v175
      %v273 = vunpack.c.l.b16 %v176
      %v274 = vunpack.c.l.b16 %v177
      %v275 = vunpack.c.l.b16 %v178
      %v276 = vunpack.c.l.b16 %v179
      %v277 = vunpack.c.l.b16 %v180
      %v278 = vpack.c.b16 %v271, %v270
      %v279 = vpack.c.b16 %v273, %v272
      %v280 = vpack.c.b16 %v275, %v274
      %v281 = vpack.c.b16 %v277, %v276
      %v287 = vsel %vm217, %v172, 0
      %289 = vmatprep.subr.bf16.mxu0 0
      %290 = vmatpush1.bf16.msra.mxu0 0
      %291 = vmatprep.subr.bf16.mxu0 0
      %292 = vmatpush1.bf16.msra.mxu0 0
      %293 = vmatprep.subr.bf16.mxu0 0
      %294 = vmatpush1.bf16.msra.mxu0 0
      %295 = vmatprep.subr.bf16.mxu0 0
      %296 = vmatpush1.bf16.msra.mxu0 0
      %297 = vmatprep.subr.bf16.mxu0 0
      %298 = vmatpush1.bf16.msra.mxu0 %v281
      %299 = vmatprep.subr.bf16.mxu0 0
      %300 = vmatpush1.bf16.msra.mxu0 %v280
      %301 = vmatprep.subr.bf16.mxu0 0
      %302 = vmatpush1.bf16.msra.mxu0 %v279
      %303 = vmatprep.subr.bf16.mxu0 0
      %304 = vmatpush1.bf16.msra.mxu0 %v278
      %305 = vmatprep.subr.bf16.mxu0 0
      %306 = vmatpush2.bf16.msra.mxu0 0
      %307 = vmatprep.subr.bf16.mxu0 0
      %308 = vmatpush2.bf16.msra.mxu0 0
      %309 = vmatprep.subr.bf16.mxu0 0
      %310 = vmatpush2.bf16.msra.mxu0 0
      %311 = vmatprep.subr.bf16.mxu0 0
      %312 = vmatpush2.bf16.msra.mxu0 0
      %313 = vmatprep.subr.bf16.mxu0 0
      %314 = vmatpush2.bf16.msra.mxu0 0
      %315 = vmatprep.subr.bf16.mxu0 0
      %316 = vmatpush2.bf16.msra.mxu0 0
      %317 = vmatprep.subr.bf16.mxu0 0
      %318 = vmatpush2.bf16.msra.mxu0 0
      %319 = vmatprep.subr.bf16.mxu0 0
      %320 = vmatpush2.bf16.msra.mxu0 0
      %321 = vmatprep.mubr.bf16.mxu0 0
      %322 = vmatmul.mubr.bf16.gmra.mxu0 %v287
      %v323 = vpop.f32.mrf.mxu0
      %v324 = vadd.f32 %v256, %v323
      %v325 = vpop.f32.mrf.mxu0
      %v326 = vpop.f32.mrf.mxu0
      %v327 = vadd.f32 %v259, %v326
      %v328 = vpop.f32.mrf.mxu0
      %329 = vdwg.mxu0
      %v330 = vld [vmem:[%s163 + $0x2] sm:$0xff]
      %v331 = vld [vmem:[%s163 + $0xa] sm:$0xff]
      %v332 = vpack.c.bf16 %v331, %v330
      %s333 = scalar_lea.vmem %s1, 64
      %v334 = vld [vmem:[%s333] sm:$0xf]
      %v335 = vld [vmem:[%s333 + $0x4] sm:$0xf]
      %v336 = vld [vmem:[%s333 + $0x8] sm:$0xf]
      %v337 = vld [vmem:[%s333 + $0xc] sm:$0xf]
      %v338 = vld [vmem:[%s333 + $0x10] sm:$0xf]
      %v339 = vld [vmem:[%s333 + $0x14] sm:$0xf]
      %v340 = vld [vmem:[%s333 + $0x18] sm:$0xf]
      %v341 = vld [vmem:[%s333 + $0x1c] sm:$0xf]
      %v350 = vunpack.c.l.b16 %v334
      %v351 = vunpack.c.l.b16 %v335
      %v352 = vunpack.c.l.b16 %v336
      %v353 = vunpack.c.l.b16 %v337
      %v354 = vunpack.c.l.b16 %v338
      %v355 = vunpack.c.l.b16 %v339
      %v356 = vunpack.c.l.b16 %v340
      %v357 = vunpack.c.l.b16 %v341
      %v358 = vpack.c.b16 %v351, %v350
      %v359 = vpack.c.b16 %v353, %v352
      %v360 = vpack.c.b16 %v355, %v354
      %v361 = vpack.c.b16 %v357, %v356
      %v367 = vsel %vm217, %v332, 0
      %369 = vmatprep.subr.bf16.mxu0 0
      %370 = vmatpush1.bf16.msra.mxu0 0
      %371 = vmatprep.subr.bf16.mxu0 0
      %372 = vmatpush1.bf16.msra.mxu0 0
      %373 = vmatprep.subr.bf16.mxu0 0
      %374 = vmatpush1.bf16.msra.mxu0 0
      %375 = vmatprep.subr.bf16.mxu0 0
      %376 = vmatpush1.bf16.msra.mxu0 0
      %377 = vmatprep.subr.bf16.mxu0 0
      %378 = vmatpush1.bf16.msra.mxu0 %v361
      %379 = vmatprep.subr.bf16.mxu0 0
      %380 = vmatpush1.bf16.msra.mxu0 %v360
      %381 = vmatprep.subr.bf16.mxu0 0
      %382 = vmatpush1.bf16.msra.mxu0 %v359
      %383 = vmatprep.subr.bf16.mxu0 0
      %384 = vmatpush1.bf16.msra.mxu0 %v358
      %385 = vmatprep.subr.bf16.mxu0 0
      %386 = vmatpush2.bf16.msra.mxu0 0
      %387 = vmatprep.subr.bf16.mxu0 0
      %388 = vmatpush2.bf16.msra.mxu0 0
      %389 = vmatprep.subr.bf16.mxu0 0
      %390 = vmatpush2.bf16.msra.mxu0 0
      %391 = vmatprep.subr.bf16.mxu0 0
      %392 = vmatpush2.bf16.msra.mxu0 0
      %393 = vmatprep.subr.bf16.mxu0 0
      %394 = vmatpush2.bf16.msra.mxu0 0
      %395 = vmatprep.subr.bf16.mxu0 0
      %396 = vmatpush2.bf16.msra.mxu0 0
      %397 = vmatprep.subr.bf16.mxu0 0
      %398 = vmatpush2.bf16.msra.mxu0 0
      %399 = vmatprep.subr.bf16.mxu0 0
      %400 = vmatpush2.bf16.msra.mxu0 0
      %401 = vmatprep.mubr.bf16.mxu0 0
      %402 = vmatmul.mubr.bf16.gmra.mxu0 %v367
      %v403 = vpop.f32.mrf.mxu0
      %v404 = vadd.f32 0.0, %v403
      %v405 = vpop.f32.mrf.mxu0
      %v406 = vpop.f32.mrf.mxu0
      %v407 = vadd.f32 0.0, %v406
      %v408 = vpop.f32.mrf.mxu0
      %409 = vdwg.mxu0
      %v410 = vadd.f32 %v324, %v404
      %v411 = vadd.f32 %v327, %v407
      %412 = vst [vmem:[%s168] sm:$0xff] %v410
      %413 = vst [vmem:[%s168 + $0x8] sm:$0xff] %v411
      %p414 = scmp.eq.s32.totalorder %s15, 0
      // Predicated region
      $region29: #{double_conv.3} parent=27 // pred_check
        %p415 = pneg %p414
      $region30: #{double_conv.3} parent=27 // pred_check_branch
        %417 = sbr.rel (%p415) target = $region32
      $region31: #{double_conv.3} parent=27 // pred_region
        %418 = vst [vmem:[%s3] sm:$0x3] 0.0
      $region32: #{double_conv.3} parent=27 // pred_fallthru
        _
      %v419 = vld [vmem:[%s3] sm:$0x1]
      %v420 = vadd.f32 %v410, %v411
      %v421 = vrot.slane %v420, 4
      %v422 = vadd.f32 %v420, %v421
      %v423 = vrot.slane %v422, 2
      %v424 = vadd.f32 %v422, %v423
      %v425 = vrot.slane %v424, 1
      %v426 = vadd.f32 %v424, %v425
      %v427 = vadd.f32 %v419, %v426
      %428 = vst [vmem:[%s3] sm:$0x1] %v427
      %v429 = vld [vmem:[%s3 + $0x1] sm:$0x1]
      %v430 = vmul.f32 %v410, %v410
      %v431 = vmul.f32 %v411, %v411
      %v432 = vadd.f32 %v430, %v431
      %v433 = vrot.slane %v432, 4
      %v434 = vadd.f32 %v432, %v433
      %v435 = vrot.slane %v434, 2
      %v436 = vadd.f32 %v434, %v435
      %v437 = vrot.slane %v436, 1
      %v438 = vadd.f32 %v436, %v437
      %v439 = vadd.f32 %v429, %v438
      %440 = vst [vmem:[%s3 + $0x1] sm:$0x1] %v439
      %p441 = scmp.lt.s32.totalorder %s15, 1
      %s442 = scalar_select %p441, %s15, 1
      %s443 = smul.addr %s442, 2
      %s444 = smul.addr %s443, 8
      %s445 = scalar_lea.vmem %s2, %s444
      // Predicated region
      $region33: #{double_conv.3} parent=27 // pred_check
        %p446 = pneg %p80
      $region34: #{double_conv.3} parent=27 // pred_check_branch
        %448 = sbr.rel (%p446) target = $region36
      $region35: #{double_conv.3} parent=27 // pred_region
        _
      $region36: #{double_conv.3} parent=27 // pred_fallthru
        _
      // Predicated region
      $region37: #{double_conv.3} parent=27 // pred_check
        %p449 = pneg %p101
      $region38: #{double_conv.3} parent=27 // pred_check_branch
        %451 = sbr.rel (%p449) target = $region40
      $region39: #{double_conv.3} parent=27 // pred_region
        _
      $region40: #{double_conv.3} parent=27 // pred_fallthru
        _
      // Predicated region
      $region41: #{double_conv.3} parent=27 // pred_check
        %p452 = pneg %p101
      $region42: #{double_conv.3} parent=27 // pred_check_branch
        %454 = sbr.rel (%p452) target = $region44
      $region43: #{double_conv.3} parent=27 // pred_region
        _
      $region44: #{double_conv.3} parent=27 // pred_fallthru
        _
    $region28: #{double_conv.3} parent=5 // pred_fallthru
      _
    %p455 = scmp.le.s32.totalorder 2, %s10
    // Predicated region
    $region45: #{double_conv.3} parent=5 // pred_check
      %p456 = pneg %p455
    $region46: #{double_conv.3} parent=5 // pred_check_branch
      %458 = sbr.rel (%p456) target = $region48
    $region47: #{double_conv.3} parent=5 // pred_region
      %s459 = ssub.s32 %s10, 2
      // Predicated region
      $region49: #{double_conv.3} parent=47 // pred_check
        %p460 = pneg %p86
      $region50: #{double_conv.3} parent=47 // pred_check_branch
        %462 = sbr.rel (%p460) target = $region52
      $region51: #{double_conv.3} parent=47 // pred_region
        %p463 = scmp.lt.s32.totalorder %s16, 1
        %s464 = scalar_select %p463, %s16, 1
        %s465 = smul.addr %s464, 2
        %s466 = smul.addr %s465, 8
        %s467 = scalar_lea.vmem %s2, %s466
      $region52: #{double_conv.3} parent=47 // pred_fallthru
        _
    $region48: #{double_conv.3} parent=5 // pred_fallthru
      _
  $region6: #{double_conv.3} parent=0 // loop_footer
    %s14 = sadd.s32 1, %s10
  $region7: #{double_conv.3} parent=0 // loop_footer_branch
    %9 = sbr.rel target = $region3
  $region8: #{double_conv.3} parent=0 // loop_exit
    _

// kernel: squeeze.4
$region0: #{squeeze.4}
  %s0 = inlined_call_operand.vmem [shape: f32[128], index: 0, kind: input, shape index: {}]
  %s1 = inlined_call_operand.vmem [shape: f32[16,8], index: 1, kind: output, shape index: {}]
  $region1: #{squeeze.4} parent=0
    #allocation0 [shape = 'u8[4096]{0}', space=vmem, size = 0x1000, scoped, tag = 'scoped mem for input reshape']
    %s3 = sshll.u32 1, 1
    %s4 = ssub.s32 %s3, 1
    %v5 = vld [vmem:[%s0] sm:%s4]
    %6 = vst [vmem:[#allocation0] sm:%s4] %v5
    %v7 = vld [vmem:[#allocation0] sm:$0x1]
    %vm8 = vcmask 64512
    %9 = vst.msk [vmem:[%s1] sm:$0x1] %vm8, %v7
    %v10 = vld [vmem:[#allocation0] sm:$0x1]
    %11 = vrot.lane.b32.xlu0 %v10, 120
    %v12 = vpop.permute.xlu0 %11
    %vm13 = vcmask 64512
    %s14 = scalar_lea.vmem %s1, 1
    %15 = vst.msk [vmem:[%s14] sm:$0x1] %vm13, %v12
    %v16 = vld [vmem:[#allocation0] sm:$0x1]
    %17 = vrot.lane.b32.xlu0 %v16, 112
    %v18 = vpop.permute.xlu0 %17
    %vm19 = vcmask 64512
    %s20 = scalar_lea.vmem %s1, 2
    %21 = vst.msk [vmem:[%s20] sm:$0x1] %vm19, %v18
    %v22 = vld [vmem:[#allocation0] sm:$0x1]
    %23 = vrot.lane.b32.xlu0 %v22, 104
    %v24 = vpop.permute.xlu0 %23
    %vm25 = vcmask 64512
    %s26 = scalar_lea.vmem %s1, 3
    %27 = vst.msk [vmem:[%s26] sm:$0x1] %vm25, %v24
    %v28 = vld [vmem:[#allocation0] sm:$0x1]
    %29 = vrot.lane.b32.xlu0 %v28, 96
    %v30 = vpop.permute.xlu0 %29
    %vm31 = vcmask 64512
    %s32 = scalar_lea.vmem %s1, 4
    %33 = vst.msk [vmem:[%s32] sm:$0x1] %vm31, %v30
    %v34 = vld [vmem:[#allocation0] sm:$0x1]
    %35 = vrot.lane.b32.xlu0 %v34, 88
    %v36 = vpop.permute.xlu0 %35
    %vm37 = vcmask 64512
    %s38 = scalar_lea.vmem %s1, 5
    %39 = vst.msk [vmem:[%s38] sm:$0x1] %vm37, %v36
    %v40 = vld [vmem:[#allocation0] sm:$0x1]
    %41 = vrot.lane.b32.xlu0 %v40, 80
    %v42 = vpop.permute.xlu0 %41
    %vm43 = vcmask 64512
    %s44 = scalar_lea.vmem %s1, 6
    %45 = vst.msk [vmem:[%s44] sm:$0x1] %vm43, %v42
    %v46 = vld [vmem:[#allocation0] sm:$0x1]
    %47 = vrot.lane.b32.xlu0 %v46, 72
    %v48 = vpop.permute.xlu0 %47
    %vm49 = vcmask 64512
    %s50 = scalar_lea.vmem %s1, 7
    %51 = vst.msk [vmem:[%s50] sm:$0x1] %vm49, %v48
    %v52 = vld [vmem:[#allocation0] sm:$0x1]
    %53 = vrot.lane.b32.xlu0 %v52, 64
    %v54 = vpop.permute.xlu0 %53
    %vm55 = vcmask 64512
    %s56 = scalar_lea.vmem %s1, 8
    %57 = vst.msk [vmem:[%s56] sm:$0x1] %vm55, %v54
    %v58 = vld [vmem:[#allocation0] sm:$0x1]
    %59 = vrot.lane.b32.xlu0 %v58, 56
    %v60 = vpop.permute.xlu0 %59
    %vm61 = vcmask 64512
    %s62 = scalar_lea.vmem %s1, 9
    %63 = vst.msk [vmem:[%s62] sm:$0x1] %vm61, %v60
    %v64 = vld [vmem:[#allocation0] sm:$0x1]
    %65 = vrot.lane.b32.xlu0 %v64, 48
    %v66 = vpop.permute.xlu0 %65
    %vm67 = vcmask 64512
    %s68 = scalar_lea.vmem %s1, 10
    %69 = vst.msk [vmem:[%s68] sm:$0x1] %vm67, %v66
    %v70 = vld [vmem:[#allocation0] sm:$0x1]
    %71 = vrot.lane.b32.xlu0 %v70, 40
    %v72 = vpop.permute.xlu0 %71
    %vm73 = vcmask 64512
    %s74 = scalar_lea.vmem %s1, 11
    %75 = vst.msk [vmem:[%s74] sm:$0x1] %vm73, %v72
    %v76 = vld [vmem:[#allocation0] sm:$0x1]
    %77 = vrot.lane.b32.xlu0 %v76, 32
    %v78 = vpop.permute.xlu0 %77
    %vm79 = vcmask 64512
    %s80 = scalar_lea.vmem %s1, 12
    %81 = vst.msk [vmem:[%s80] sm:$0x1] %vm79, %v78
    %v82 = vld [vmem:[#allocation0] sm:$0x1]
    %83 = vrot.lane.b32.xlu0 %v82, 24
    %v84 = vpop.permute.xlu0 %83
    %vm85 = vcmask 64512
    %s86 = scalar_lea.vmem %s1, 13
    %87 = vst.msk [vmem:[%s86] sm:$0x1] %vm85, %v84
    %v88 = vld [vmem:[#allocation0] sm:$0x1]
    %89 = vrot.lane.b32.xlu0 %v88, 16
    %v90 = vpop.permute.xlu0 %89
    %vm91 = vcmask 64512
    %s92 = scalar_lea.vmem %s1, 14
    %93 = vst.msk [vmem:[%s92] sm:$0x1] %vm91, %v90
    %v94 = vld [vmem:[#allocation0] sm:$0x1]
    %95 = vrot.lane.b32.xlu0 %v94, 8
    %v96 = vpop.permute.xlu0 %95
    %vm97 = vcmask 64512
    %s98 = scalar_lea.vmem %s1, 15
    %99 = vst.msk [vmem:[%s98] sm:$0x1] %vm97, %v96

// kernel: tile.27
$region0: #{tile.27}
  #allocation0 [shape = 's32[1]{0}', space=sflag, size = 0x4, scoped, tag = 'scoped memory for tile.27']
  %s0 = inlined_call_operand.vmem [shape: f32[8], index: 0, kind: input, shape index: {}]
  %s1 = inlined_call_operand.vmem [shape: f32[16,8], index: 1, kind: output, shape index: {}]
  // Predicated region
  $region2: #{tile.27} parent=0 // pred_check
    _
  $region3: #{tile.27} parent=0 // pred_check_branch
    %3 = sbr.rel (0) target = $region5
  $region4: #{tile.27} parent=0 // pred_region
    _
  $region5: #{tile.27} parent=0 // pred_fallthru
    _
  %v4 = vld [vmem:[%s0] ss:$0 sm:$0xff]
  %5 = vst [vmem:[%s1] sm:$0xff] %v4
  %s6 = scalar_lea.vmem %s1, 8
  %7 = vst [vmem:[%s6] sm:$0xff] %v4

// kernel: tile.29
$region0: #{tile.29}
  %s0 = inlined_call_operand.vmem [shape: f32[16,8], index: 0, kind: input, shape index: {}]
  %s1 = inlined_call_operand.vmem [shape: f32[1,128], index: 1, kind: output, shape index: {}]
  $region1: #{tile.29} parent=0
    #allocation0 [shape = 'u8[4096]{0}', space=vmem, size = 0x1000, scoped, tag = 'scoped mem for output reshape']
    %v2 = vld [vmem:[%s0] sm:$0x1]
    %vm3 = vcmask 64512
    %4 = vst.msk [vmem:[#allocation0] sm:$0x1] %vm3, %v2
    %s5 = scalar_lea.vmem %s0, 15
    %v6 = vld [vmem:[%s5] sm:$0x1]
    %7 = vrot.lane.b32.xlu0 %v6, 120
    %v8 = vpop.permute.xlu0 %7
    %vm9 = vcmask 1048512
    %10 = vst.msk [vmem:[#allocation0] sm:$0x1] %vm9, %v8
    %s11 = scalar_lea.vmem %s0, 14
    %v12 = vld [vmem:[%s11] sm:$0x1]
    %13 = vrot.lane.b32.xlu0 %v12, 112
    %v14 = vpop.permute.xlu0 %13
    %vm15 = vcmask 982912
    %16 = vst.msk [vmem:[#allocation0] sm:$0x1] %vm15, %v14
    %s17 = scalar_lea.vmem %s0, 13
    %v18 = vld [vmem:[%s17] sm:$0x1]
    %19 = vrot.lane.b32.xlu0 %v18, 104
    %v20 = vpop.permute.xlu0 %19
    %vm21 = vcmask 917312
    %22 = vst.msk [vmem:[#allocation0] sm:$0x1] %vm21, %v20
    %s23 = scalar_lea.vmem %s0, 12
    %v24 = vld [vmem:[%s23] sm:$0x1]
    %25 = vrot.lane.b32.xlu0 %v24, 96
    %v26 = vpop.permute.xlu0 %25
    %vm27 = vcmask 851712
    %28 = vst.msk [vmem:[#allocation0] sm:$0x1] %vm27, %v26
    %s29 = scalar_lea.vmem %s0, 11
    %v30 = vld [vmem:[%s29] sm:$0x1]
    %31 = vrot.lane.b32.xlu0 %v30, 88
    %v32 = vpop.permute.xlu0 %31
    %vm33 = vcmask 786112
    %34 = vst.msk [vmem:[#allocation0] sm:$0x1] %vm33, %v32
    %s35 = scalar_lea.vmem %s0, 10
    %v36 = vld [vmem:[%s35] sm:$0x1]
    %37 = vrot.lane.b32.xlu0 %v36, 80
    %v38 = vpop.permute.xlu0 %37
    %vm39 = vcmask 720512
    %40 = vst.msk [vmem:[#allocation0] sm:$0x1] %vm39, %v38
    %s41 = scalar_lea.vmem %s0, 9
    %v42 = vld [vmem:[%s41] sm:$0x1]
    %43 = vrot.lane.b32.xlu0 %v42, 72
    %v44 = vpop.permute.xlu0 %43
    %vm45 = vcmask 654912
    %46 = vst.msk [vmem:[#allocation0] sm:$0x1] %vm45, %v44
    %s47 = scalar_lea.vmem %s0, 8
    %v48 = vld [vmem:[%s47] sm:$0x1]
    %49 = vrot.lane.b32.xlu0 %v48, 64
    %v50 = vpop.permute.xlu0 %49
    %vm51 = vcmask 589312
    %52 = vst.msk [vmem:[#allocation0] sm:$0x1] %vm51, %v50
    %s53 = scalar_lea.vmem %s0, 7
    %v54 = vld [vmem:[%s53] sm:$0x1]
    %55 = vrot.lane.b32.xlu0 %v54, 56
    %v56 = vpop.permute.xlu0 %55
    %vm57 = vcmask 523712
    %58 = vst.msk [vmem:[#allocation0] sm:$0x1] %vm57, %v56
    %s59 = scalar_lea.vmem %s0, 6
    %v60 = vld [vmem:[%s59] sm:$0x1]
    %61 = vrot.lane.b32.xlu0 %v60, 48
    %v62 = vpop.permute.xlu0 %61
    %vm63 = vcmask 458112
    %64 = vst.msk [vmem:[#allocation0] sm:$0x1] %vm63, %v62
    %s65 = scalar_lea.vmem %s0, 5
    %v66 = vld [vmem:[%s65] sm:$0x1]
    %67 = vrot.lane.b32.xlu0 %v66, 40
    %v68 = vpop.permute.xlu0 %67
    %vm69 = vcmask 392512
    %70 = vst.msk [vmem:[#allocation0] sm:$0x1] %vm69, %v68
    %s71 = scalar_lea.vmem %s0, 4
    %v72 = vld [vmem:[%s71] sm:$0x1]
    %73 = vrot.lane.b32.xlu0 %v72, 32
    %v74 = vpop.permute.xlu0 %73
    %vm75 = vcmask 326912
    %76 = vst.msk [vmem:[#allocation0] sm:$0x1] %vm75, %v74
    %s77 = scalar_lea.vmem %s0, 3
    %v78 = vld [vmem:[%s77] sm:$0x1]
    %79 = vrot.lane.b32.xlu0 %v78, 24
    %v80 = vpop.permute.xlu0 %79
    %vm81 = vcmask 261312
    %82 = vst.msk [vmem:[#allocation0] sm:$0x1] %vm81, %v80
    %s83 = scalar_lea.vmem %s0, 2
    %v84 = vld [vmem:[%s83] sm:$0x1]
    %85 = vrot.lane.b32.xlu0 %v84, 16
    %v86 = vpop.permute.xlu0 %85
    %vm87 = vcmask 195712
    %88 = vst.msk [vmem:[#allocation0] sm:$0x1] %vm87, %v86
    %s89 = scalar_lea.vmem %s0, 1
    %v90 = vld [vmem:[%s89] sm:$0x1]
    %91 = vrot.lane.b32.xlu0 %v90, 8
    %v92 = vpop.permute.xlu0 %91
    %vm93 = vcmask 130112
    %94 = vst.msk [vmem:[#allocation0] sm:$0x1] %vm93, %v92
    %s96 = sshll.u32 1, 1
    %s97 = ssub.s32 %s96, 1
    %v99 = vld [vmem:[#allocation0] sm:%s97]
    %s100 = sshll.u32 1, 1
    %s101 = ssub.s32 %s100, 1
    %102 = vst [vmem:[%s1] sm:%s101] %v99

// kernel: double_conv.4
$region0: #{double_conv.4}
  #allocation0 [shape = 'u32[]', space=smem, size = 0x4, offset = 0x4, fixed_abs, tag = 'smem constant byte address 0x4 - core index']
  #allocation1 [shape = 'u32[144,128]{1,0:T(1,128)}', space=vmem, size = 0x12000, scoped, tag = 'internal scratch']
  #allocation2 [shape = 'f32[18,128]{1,0:T(8,128)}', space=vmem, size = 0x3000, scoped, tag = 'scratch operand']
  %s0 = inlined_call_operand.vmem [shape: f32[2,16,128], index: 0, kind: input, shape index: {}]
  %s1 = inlined_call_operand.vmem [shape: f32[2,128], index: 1, kind: input, shape index: {}]
  %s2 = inlined_call_operand.vmem [shape: bf16[3,128,128], index: 2, kind: input, shape index: {}]
  %s3 = inlined_call_operand.vmem [shape: f32[2,16,128], index: 3, kind: output, shape index: {0}]
  %s4 = inlined_call_operand.vmem [shape: f32[2,128], index: 4, kind: output, shape index: {1}]
  %5 = xla_tuple %s3, %s4
  %s6 = sld [smem:[#allocation0]]
  $region57: #{double_conv.4} parent=0
    _
  %s8 = ssub.s32 1, %s6
  %s9 = scalar_select 0, %s8, %s6
  loop: start=0, step=1, limit=4
  $region2: #{double_conv.4} parent=0 // loop_pre_header
    _
  $region3: #{double_conv.4} parent=0 // loop_header
    %s11 = sphi 0, %s15
    %p12 = scmp.ge.s32.totalorder %s11, 4
    %s21 = sphi 0, %s23
    %s24 = sphi 0, %s21
    %s25 = sphi 0, %s24
    %s41 = sphi 0, %s25
    %s45 = sphi 0, %s45
    %s47 = sphi 0, %s45
    %s48 = sphi 0, %s47
    %s62 = sphi 0, %s48
    %s66 = sphi 0, %s66
    %s68 = sphi 0, %s66
    %s69 = sphi 0, %s68
    %s83 = sphi 0, %s69
    %s89 = sphi 0, %s91
    %s92 = sphi 0, %s89
    %s93 = sphi 0, %s92
    %s109 = sphi 0, %s93
    %s113 = sphi 0, %s113
    %s115 = sphi 0, %s113
    %s116 = sphi 0, %s115
    %s130 = sphi 0, %s116
  $region4: #{double_conv.4} parent=0 // loop_header_branch
    %14 = sbr.rel (%p12) target = $region8
  $region5: #{double_conv.4} parent=0 // loop_body
    %s16 = ssub.s32 %s11, 1
    %s17 = ssub.s32 %s11, 2
    %s18 = sadd.s32 %s11, 1
    %s19 = ssub.s32 %s11, %s18
    %p20 = scmp.eq.s32.totalorder %s19, 0
    %s22 = sadd.s32 %s21, 1
    %s23 = scalar_select %p20, %s21, %s22
    %p26 = pneg %p20
    %p27 = scmp.eq.s32.totalorder %s11, 1
    %p28 = por %p26, %p27
    %p29 = scmp.ne.s32.totalorder %s21, %s24
    %p30 = scmp.eq.s32.totalorder %s11, 0
    %p31 = por %p29, %p30
    %p32 = scmp.ne.s32.totalorder %s21, %s24
    %p33 = scmp.eq.s32.totalorder %s16, 1
    %p34 = por %p32, %p33
    %p35 = scmp.ne.s32.totalorder %s24, %s25
    %p36 = scmp.eq.s32.totalorder %s16, 0
    %p37 = por %p35, %p36
    %p38 = scmp.ne.s32.totalorder %s24, %s25
    %p39 = scmp.eq.s32.totalorder %s17, 1
    %p40 = por %p38, %p39
    %p42 = scmp.ne.s32.totalorder %s25, %s41
    %p43 = scmp.eq.s32.totalorder %s17, 0
    %p44 = por %p42, %p43
    %s46 = sadd.s32 %s45, 1
    %p49 = scmp.eq.s32.totalorder %s11, 1
    %p50 = scmp.ne.s32.totalorder %s45, %s47
    %p51 = scmp.eq.s32.totalorder %s11, 0
    %p52 = por %p50, %p51
    %p53 = scmp.ne.s32.totalorder %s45, %s47
    %p54 = scmp.eq.s32.totalorder %s16, 1
    %p55 = por %p53, %p54
    %p56 = scmp.ne.s32.totalorder %s47, %s48
    %p57 = scmp.eq.s32.totalorder %s16, 0
    %p58 = por %p56, %p57
    %p59 = scmp.ne.s32.totalorder %s47, %s48
    %p60 = scmp.eq.s32.totalorder %s17, 1
    %p61 = por %p59, %p60
    %p63 = scmp.ne.s32.totalorder %s48, %s62
    %p64 = scmp.eq.s32.totalorder %s17, 0
    %p65 = por %p63, %p64
    %s67 = sadd.s32 %s66, 1
    %p70 = scmp.eq.s32.totalorder %s11, 1
    %p71 = scmp.ne.s32.totalorder %s66, %s68
    %p72 = scmp.eq.s32.totalorder %s11, 0
    %p73 = por %p71, %p72
    %p74 = scmp.ne.s32.totalorder %s66, %s68
    %p75 = scmp.eq.s32.totalorder %s16, 1
    %p76 = por %p74, %p75
    %p77 = scmp.ne.s32.totalorder %s68, %s69
    %p78 = scmp.eq.s32.totalorder %s16, 0
    %p79 = por %p77, %p78
    %p80 = scmp.ne.s32.totalorder %s68, %s69
    %p81 = scmp.eq.s32.totalorder %s17, 1
    %p82 = por %p80, %p81
    %p84 = scmp.ne.s32.totalorder %s69, %s83
    %p85 = scmp.eq.s32.totalorder %s17, 0
    %p86 = por %p84, %p85
    %s87 = ssub.s32 %s11, %s18
    %p88 = scmp.eq.s32.totalorder %s87, 0
    %s90 = sadd.s32 %s89, 1
    %s91 = scalar_select %p88, %s89, %s90
    %p94 = pneg %p88
    %p95 = scmp.eq.s32.totalorder %s11, 1
    %p96 = por %p94, %p95
    %p97 = scmp.ne.s32.totalorder %s89, %s92
    %p98 = scmp.eq.s32.totalorder %s11, 0
    %p99 = por %p97, %p98
    %p100 = scmp.ne.s32.totalorder %s89, %s92
    %p101 = scmp.eq.s32.totalorder %s16, 1
    %p102 = por %p100, %p101
    %p103 = scmp.ne.s32.totalorder %s92, %s93
    %p104 = scmp.eq.s32.totalorder %s16, 0
    %p105 = por %p103, %p104
    %p106 = scmp.ne.s32.totalorder %s92, %s93
    %p107 = scmp.eq.s32.totalorder %s17, 1
    %p108 = por %p106, %p107
    %p110 = scmp.ne.s32.totalorder %s93, %s109
    %p111 = scmp.eq.s32.totalorder %s17, 0
    %p112 = por %p110, %p111
    %s114 = sadd.s32 %s113, 1
    %p117 = scmp.eq.s32.totalorder %s11, 1
    %p118 = scmp.ne.s32.totalorder %s113, %s115
    %p119 = scmp.eq.s32.totalorder %s11, 0
    %p120 = por %p118, %p119
    %p121 = scmp.ne.s32.totalorder %s113, %s115
    %p122 = scmp.eq.s32.totalorder %s16, 1
    %p123 = por %p121, %p122
    %p124 = scmp.ne.s32.totalorder %s115, %s116
    %p125 = scmp.eq.s32.totalorder %s16, 0
    %p126 = por %p124, %p125
    %p127 = scmp.ne.s32.totalorder %s115, %s116
    %p128 = scmp.eq.s32.totalorder %s17, 1
    %p129 = por %p127, %p128
    %p131 = scmp.ne.s32.totalorder %s116, %s130
    %p132 = scmp.eq.s32.totalorder %s17, 0
    %p133 = por %p131, %p132
    %p134 = scmp.le.s32.totalorder 1, %s11
    %p135 = scmp.lt.s32.totalorder %s11, 3
    %p136 = pnand %p134, %p135
    %p137 = pneg %p136
    // Predicated region
    $region9: #{double_conv.4} parent=5 // pred_check
      _
    $region10: #{double_conv.4} parent=5 // pred_check_branch
      %139 = sbr.rel (%p136) target = $region12
    $region11: #{double_conv.4} parent=5 // pred_region
      %s140 = ssub.s32 %s11, 1
      // Predicated region
      $region13: #{double_conv.4} parent=11 // pred_check
        %p141 = pneg %p58
      $region14: #{double_conv.4} parent=11 // pred_check_branch
        %143 = sbr.rel (%p141) target = $region16
      $region15: #{double_conv.4} parent=11 // pred_region
        _
      $region16: #{double_conv.4} parent=11 // pred_fallthru
        _
      // Predicated region
      $region17: #{double_conv.4} parent=11 // pred_check
        %p144 = pneg %p79
      $region18: #{double_conv.4} parent=11 // pred_check_branch
        %146 = sbr.rel (%p144) target = $region20
      $region19: #{double_conv.4} parent=11 // pred_region
        _
      $region20: #{double_conv.4} parent=11 // pred_fallthru
        _
    $region12: #{double_conv.4} parent=5 // pred_fallthru
      _
    %p147 = scmp.lt.s32.totalorder %s11, 2
    // Predicated region
    $region21: #{double_conv.4} parent=5 // pred_check
      %p148 = pneg %p147
    $region22: #{double_conv.4} parent=5 // pred_check_branch
      %150 = sbr.rel (%p148) target = $region24
    $region23: #{double_conv.4} parent=5 // pred_region
      // Predicated region
      $region25: #{double_conv.4} parent=23 // pred_check
        %p151 = pneg %p31
      $region26: #{double_conv.4} parent=23 // pred_check_branch
        %153 = sbr.rel (%p151) target = $region28
      $region27: #{double_conv.4} parent=23 // pred_region
        %p154 = scmp.lt.s32.totalorder %s11, 1
        %s155 = scalar_select %p154, %s11, 1
        %s156 = smul.addr %s155, 2
        %s157 = smul.addr %s156, 8
        %s158 = scalar_lea.vmem %s0, %s157
      $region28: #{double_conv.4} parent=23 // pred_fallthru
        _
    $region24: #{double_conv.4} parent=5 // pred_fallthru
      _
    %p159 = scmp.le.s32.totalorder 1, %s11
    %p160 = scmp.lt.s32.totalorder %s11, 3
    %p161 = pnand %p159, %p160
    %p162 = pneg %p161
    // Predicated region
    $region29: #{double_conv.4} parent=5 // pred_check
      _
    $region30: #{double_conv.4} parent=5 // pred_check_branch
      %164 = sbr.rel (%p161) target = $region32
    $region31: #{double_conv.4} parent=5 // pred_region
      %s165 = ssub.s32 %s11, 1
      %p166 = scmp.lt.s32.totalorder %s16, 1
      %s167 = scalar_select %p166, %s16, 1
      %s168 = smul.addr %s167, 2
      %s169 = smul.addr %s168, 8
      %s170 = scalar_lea.vmem %s0, %s169
      %p171 = pneg %p37
      %p172 = pneg %p34
      %p173 = pneg %p58
      %p174 = pneg %p55
      %p175 = pneg %p79
      %p176 = pneg %p76
      %p177 = pneg %p105
      %p178 = pneg %p102
      %p179 = scmp.lt.s32.totalorder %s16, 1
      %s180 = scalar_select %p179, %s16, 1
      %s181 = smul.addr %s180, 2
      %s182 = smul.addr %s181, 8
      %s183 = scalar_lea.vmem %s3, %s182
      %p184 = pneg %p126
      %p185 = pneg %p123
      %p186 = scmp.lt.s32.totalorder %s16, 1
      %s187 = scalar_select %p186, %s16, 1
      %s188 = smul.addr %s187, 2
      %s189 = smul.addr %s188, 8
      %s190 = scalar_lea.vmem %s0, %s189
      %p191 = scmp.lt.s32.totalorder %s16, 1
      %s192 = scalar_select %p191, %s16, 1
      %s193 = smul.addr %s192, 2
      %s194 = smul.addr %s193, 8
      %s195 = scalar_lea.vmem %s3, %s194
      %p197 = scmp.eq.s32.totalorder %s16, 0
      // Predicated region
      $region33: #{double_conv.4} parent=31 // pred_check
        %p198 = pneg %p197
      $region34: #{double_conv.4} parent=31 // pred_check_branch
        %200 = sbr.rel (%p198) target = $region36
      $region35: #{double_conv.4} parent=31 // pred_region
        %201 = vst [vmem:[#allocation2] sm:$0x1] 0.0
        %202 = vst [vmem:[#allocation2 + $0x11] sm:$0x1] 0.0
        %203 = vst [vmem:[%s4] sm:$0x3] 0.0
      $region36: #{double_conv.4} parent=31 // pred_fallthru
        _
      %v204 = vld [vmem:[%s190] sm:$0xff]
      %v205 = vld [vmem:[%s190 + $0x8] sm:$0xff]
      %v206 = vld [vmem:[%s1] sm:$0x1]
      %v207 = vlaneseq
      %v208 = vshrl.u32 %v207, 7
      %v209 = vsub.s32 0, %v208
      %v210 = vrot.slane %v206, %v209
      %v211 = vmul.f32 %v204, %v210
      %v212 = vmul.f32 %v205, %v210
      %v213 = vld [vmem:[%s1 + $0x1] sm:$0x1]
      %v214 = vlaneseq
      %v215 = vshrl.u32 %v214, 7
      %v216 = vsub.s32 0, %v215
      %v217 = vrot.slane %v213, %v216
      %v218 = vadd.f32 %v211, %v217
      %v219 = vadd.f32 %v212, %v217
      %v220 = vmax.f32 %v218, 0.0
      %v221 = vmax.f32 %v219, 0.0
      %222 = vst [vmem:[#allocation2 + $0x1] sm:$0xff] %v220
      %223 = vst [vmem:[#allocation2 + $0x9] sm:$0xff] %v221
      %v224 = vld [vmem:[#allocation2] sm:$0xff]
      %v225 = vld [vmem:[#allocation2 + $0x8] sm:$0xff]
      %v226 = vpack.c.bf16 %v225, %v224
      %v227 = vld [vmem:[%s2] sm:$0xf]
      %v228 = vld [vmem:[%s2 + $0x4] sm:$0xf]
      %v229 = vld [vmem:[%s2 + $0x8] sm:$0xf]
      %v230 = vld [vmem:[%s2 + $0xc] sm:$0xf]
      %v231 = vld [vmem:[%s2 + $0x10] sm:$0xf]
      %v232 = vld [vmem:[%s2 + $0x14] sm:$0xf]
      %v233 = vld [vmem:[%s2 + $0x18] sm:$0xf]
      %v234 = vld [vmem:[%s2 + $0x1c] sm:$0xf]
      %v235 = vld [vmem:[%s2 + $0x20] sm:$0xf]
      %v236 = vld [vmem:[%s2 + $0x24] sm:$0xf]
      %v237 = vld [vmem:[%s2 + $0x28] sm:$0xf]
      %v238 = vld [vmem:[%s2 + $0x2c] sm:$0xf]
      %v239 = vld [vmem:[%s2 + $0x30] sm:$0xf]
      %v240 = vld [vmem:[%s2 + $0x34] sm:$0xf]
      %v241 = vld [vmem:[%s2 + $0x38] sm:$0xf]
      %v242 = vld [vmem:[%s2 + $0x3c] sm:$0xf]
      %v243 = vld [vmem:[#allocation2 + $0x1] sm:$0xff]
      %v244 = vld [vmem:[#allocation2 + $0x9] sm:$0xff]
      %v245 = vpack.c.bf16 %v244, %v243
      %s246 = scalar_lea.vmem %s2, 64
      %v247 = vld [vmem:[%s246] sm:$0xf]
      %v248 = vld [vmem:[%s246 + $0x4] sm:$0xf]
      %v249 = vld [vmem:[%s246 + $0x8] sm:$0xf]
      %v250 = vld [vmem:[%s246 + $0xc] sm:$0xf]
      %v251 = vld [vmem:[%s246 + $0x10] sm:$0xf]
      %v252 = vld [vmem:[%s246 + $0x14] sm:$0xf]
      %v253 = vld [vmem:[%s246 + $0x18] sm:$0xf]
      %v254 = vld [vmem:[%s246 + $0x1c] sm:$0xf]
      %v255 = vld [vmem:[%s246 + $0x20] sm:$0xf]
      %v256 = vld [vmem:[%s246 + $0x24] sm:$0xf]
      %v257 = vld [vmem:[%s246 + $0x28] sm:$0xf]
      %v258 = vld [vmem:[%s246 + $0x2c] sm:$0xf]
      %v259 = vld [vmem:[%s246 + $0x30] sm:$0xf]
      %v260 = vld [vmem:[%s246 + $0x34] sm:$0xf]
      %v261 = vld [vmem:[%s246 + $0x38] sm:$0xf]
      %v262 = vld [vmem:[%s246 + $0x3c] sm:$0xf]
      %v279 = vunpack.c.l.b16 %v247
      %v280 = vunpack.c.l.b16 %v248
      %v281 = vunpack.c.l.b16 %v249
      %v282 = vunpack.c.l.b16 %v250
      %v283 = vunpack.c.l.b16 %v251
      %v284 = vunpack.c.l.b16 %v252
      %v285 = vunpack.c.l.b16 %v253
      %v286 = vunpack.c.l.b16 %v254
      %v287 = vunpack.c.l.b16 %v255
      %v288 = vunpack.c.l.b16 %v256
      %v289 = vunpack.c.l.b16 %v257
      %v290 = vunpack.c.l.b16 %v258
      %v291 = vunpack.c.l.b16 %v259
      %v292 = vunpack.c.l.b16 %v260
      %v293 = vunpack.c.l.b16 %v261
      %v294 = vunpack.c.l.b16 %v262
      %v295 = vpack.c.b16 %v280, %v279
      %v296 = vpack.c.b16 %v282, %v281
      %v297 = vpack.c.b16 %v284, %v283
      %v298 = vpack.c.b16 %v286, %v285
      %v299 = vpack.c.b16 %v288, %v287
      %v300 = vpack.c.b16 %v290, %v289
      %v301 = vpack.c.b16 %v292, %v291
      %v302 = vpack.c.b16 %v294, %v293
      %311 = vmatprep.subr.bf16.mxu0 0
      %312 = vmatpush1.bf16.msra.mxu0 %v302
      %313 = vmatprep.subr.bf16.mxu0 0
      %314 = vmatpush1.bf16.msra.mxu0 %v301
      %315 = vmatprep.subr.bf16.mxu0 0
      %316 = vmatpush1.bf16.msra.mxu0 %v300
      %317 = vmatprep.subr.bf16.mxu0 0
      %318 = vmatpush1.bf16.msra.mxu0 %v299
      %319 = vmatprep.subr.bf16.mxu0 0
      %320 = vmatpush1.bf16.msra.mxu0 %v298
      %321 = vmatprep.subr.bf16.mxu0 0
      %322 = vmatpush1.bf16.msra.mxu0 %v297
      %323 = vmatprep.subr.bf16.mxu0 0
      %324 = vmatpush1.bf16.msra.mxu0 %v296
      %325 = vmatprep.subr.bf16.mxu0 0
      %326 = vmatpush1.bf16.msra.mxu0 %v295
      %327 = vmatprep.subr.bf16.mxu0 0
      %328 = vmatpush2.bf16.msra.mxu0 0
      %329 = vmatprep.subr.bf16.mxu0 0
      %330 = vmatpush2.bf16.msra.mxu0 0
      %331 = vmatprep.subr.bf16.mxu0 0
      %332 = vmatpush2.bf16.msra.mxu0 0
      %333 = vmatprep.subr.bf16.mxu0 0
      %334 = vmatpush2.bf16.msra.mxu0 0
      %335 = vmatprep.subr.bf16.mxu0 0
      %336 = vmatpush2.bf16.msra.mxu0 0
      %337 = vmatprep.subr.bf16.mxu0 0
      %338 = vmatpush2.bf16.msra.mxu0 0
      %339 = vmatprep.subr.bf16.mxu0 0
      %340 = vmatpush2.bf16.msra.mxu0 0
      %341 = vmatprep.subr.bf16.mxu0 0
      %342 = vmatpush2.bf16.msra.mxu0 0
      %343 = vmatprep.mubr.bf16.mxu0 0
      %344 = vmatmul.mubr.bf16.gmra.mxu0 %v245
      %v345 = vpop.f32.mrf.mxu0
      %v346 = vadd.f32 0.0, %v345
      %v347 = vpop.f32.mrf.mxu0
      %v348 = vpop.f32.mrf.mxu0
      %v349 = vadd.f32 0.0, %v348
      %v350 = vpop.f32.mrf.mxu0
      %351 = vdwg.mxu0
      %v368 = vunpack.c.l.b16 %v227
      %v369 = vunpack.c.l.b16 %v228
      %v370 = vunpack.c.l.b16 %v229
      %v371 = vunpack.c.l.b16 %v230
      %v372 = vunpack.c.l.b16 %v231
      %v373 = vunpack.c.l.b16 %v232
      %v374 = vunpack.c.l.b16 %v233
      %v375 = vunpack.c.l.b16 %v234
      %v376 = vunpack.c.l.b16 %v235
      %v377 = vunpack.c.l.b16 %v236
      %v378 = vunpack.c.l.b16 %v237
      %v379 = vunpack.c.l.b16 %v238
      %v380 = vunpack.c.l.b16 %v239
      %v381 = vunpack.c.l.b16 %v240
      %v382 = vunpack.c.l.b16 %v241
      %v383 = vunpack.c.l.b16 %v242
      %v384 = vpack.c.b16 %v369, %v368
      %v385 = vpack.c.b16 %v371, %v370
      %v386 = vpack.c.b16 %v373, %v372
      %v387 = vpack.c.b16 %v375, %v374
      %v388 = vpack.c.b16 %v377, %v376
      %v389 = vpack.c.b16 %v379, %v378
      %v390 = vpack.c.b16 %v381, %v380
      %v391 = vpack.c.b16 %v383, %v382
      %400 = vmatprep.subr.bf16.mxu0 0
      %401 = vmatpush1.bf16.msra.mxu0 %v391
      %402 = vmatprep.subr.bf16.mxu0 0
      %403 = vmatpush1.bf16.msra.mxu0 %v390
      %404 = vmatprep.subr.bf16.mxu0 0
      %405 = vmatpush1.bf16.msra.mxu0 %v389
      %406 = vmatprep.subr.bf16.mxu0 0
      %407 = vmatpush1.bf16.msra.mxu0 %v388
      %408 = vmatprep.subr.bf16.mxu0 0
      %409 = vmatpush1.bf16.msra.mxu0 %v387
      %410 = vmatprep.subr.bf16.mxu0 0
      %411 = vmatpush1.bf16.msra.mxu0 %v386
      %412 = vmatprep.subr.bf16.mxu0 0
      %413 = vmatpush1.bf16.msra.mxu0 %v385
      %414 = vmatprep.subr.bf16.mxu0 0
      %415 = vmatpush1.bf16.msra.mxu0 %v384
      %416 = vmatprep.subr.bf16.mxu0 0
      %417 = vmatpush2.bf16.msra.mxu0 0
      %418 = vmatprep.subr.bf16.mxu0 0
      %419 = vmatpush2.bf16.msra.mxu0 0
      %420 = vmatprep.subr.bf16.mxu0 0
      %421 = vmatpush2.bf16.msra.mxu0 0
      %422 = vmatprep.subr.bf16.mxu0 0
      %423 = vmatpush2.bf16.msra.mxu0 0
      %424 = vmatprep.subr.bf16.mxu0 0
      %425 = vmatpush2.bf16.msra.mxu0 0
      %426 = vmatprep.subr.bf16.mxu0 0
      %427 = vmatpush2.bf16.msra.mxu0 0
      %428 = vmatprep.subr.bf16.mxu0 0
      %429 = vmatpush2.bf16.msra.mxu0 0
      %430 = vmatprep.subr.bf16.mxu0 0
      %431 = vmatpush2.bf16.msra.mxu0 0
      %432 = vmatprep.mubr.bf16.mxu0 0
      %433 = vmatmul.mubr.bf16.gmra.mxu0 %v226
      %v434 = vpop.f32.mrf.mxu0
      %v435 = vadd.f32 %v346, %v434
      %v436 = vpop.f32.mrf.mxu0
      %v437 = vpop.f32.mrf.mxu0
      %v438 = vadd.f32 %v349, %v437
      %v439 = vpop.f32.mrf.mxu0
      %440 = vdwg.mxu0
      %v441 = vld [vmem:[#allocation2 + $0x2] sm:$0xff]
      %v442 = vld [vmem:[#allocation2 + $0xa] sm:$0xff]
      %v443 = vpack.c.bf16 %v442, %v441
      %s444 = scalar_lea.vmem %s2, 128
      %v445 = vld [vmem:[%s444] sm:$0xf]
      %v446 = vld [vmem:[%s444 + $0x4] sm:$0xf]
      %v447 = vld [vmem:[%s444 + $0x8] sm:$0xf]
      %v448 = vld [vmem:[%s444 + $0xc] sm:$0xf]
      %v449 = vld [vmem:[%s444 + $0x10] sm:$0xf]
      %v450 = vld [vmem:[%s444 + $0x14] sm:$0xf]
      %v451 = vld [vmem:[%s444 + $0x18] sm:$0xf]
      %v452 = vld [vmem:[%s444 + $0x1c] sm:$0xf]
      %v453 = vld [vmem:[%s444 + $0x20] sm:$0xf]
      %v454 = vld [vmem:[%s444 + $0x24] sm:$0xf]
      %v455 = vld [vmem:[%s444 + $0x28] sm:$0xf]
      %v456 = vld [vmem:[%s444 + $0x2c] sm:$0xf]
      %v457 = vld [vmem:[%s444 + $0x30] sm:$0xf]
      %v458 = vld [vmem:[%s444 + $0x34] sm:$0xf]
      %v459 = vld [vmem:[%s444 + $0x38] sm:$0xf]
      %v460 = vld [vmem:[%s444 + $0x3c] sm:$0xf]
      %v477 = vunpack.c.l.b16 %v445
      %v478 = vunpack.c.l.b16 %v446
      %v479 = vunpack.c.l.b16 %v447
      %v480 = vunpack.c.l.b16 %v448
      %v481 = vunpack.c.l.b16 %v449
      %v482 = vunpack.c.l.b16 %v450
      %v483 = vunpack.c.l.b16 %v451
      %v484 = vunpack.c.l.b16 %v452
      %v485 = vunpack.c.l.b16 %v453
      %v486 = vunpack.c.l.b16 %v454
      %v487 = vunpack.c.l.b16 %v455
      %v488 = vunpack.c.l.b16 %v456
      %v489 = vunpack.c.l.b16 %v457
      %v490 = vunpack.c.l.b16 %v458
      %v491 = vunpack.c.l.b16 %v459
      %v492 = vunpack.c.l.b16 %v460
      %v493 = vpack.c.b16 %v478, %v477
      %v494 = vpack.c.b16 %v480, %v479
      %v495 = vpack.c.b16 %v482, %v481
      %v496 = vpack.c.b16 %v484, %v483
      %v497 = vpack.c.b16 %v486, %v485
      %v498 = vpack.c.b16 %v488, %v487
      %v499 = vpack.c.b16 %v490, %v489
      %v500 = vpack.c.b16 %v492, %v491
      %509 = vmatprep.subr.bf16.mxu0 0
      %510 = vmatpush1.bf16.msra.mxu0 %v500
      %511 = vmatprep.subr.bf16.mxu0 0
      %512 = vmatpush1.bf16.msra.mxu0 %v499
      %513 = vmatprep.subr.bf16.mxu0 0
      %514 = vmatpush1.bf16.msra.mxu0 %v498
      %515 = vmatprep.subr.bf16.mxu0 0
      %516 = vmatpush1.bf16.msra.mxu0 %v497
      %517 = vmatprep.subr.bf16.mxu0 0
      %518 = vmatpush1.bf16.msra.mxu0 %v496
      %519 = vmatprep.subr.bf16.mxu0 0
      %520 = vmatpush1.bf16.msra.mxu0 %v495
      %521 = vmatprep.subr.bf16.mxu0 0
      %522 = vmatpush1.bf16.msra.mxu0 %v494
      %523 = vmatprep.subr.bf16.mxu0 0
      %524 = vmatpush1.bf16.msra.mxu0 %v493
      %525 = vmatprep.subr.bf16.mxu0 0
      %526 = vmatpush2.bf16.msra.mxu0 0
      %527 = vmatprep.subr.bf16.mxu0 0
      %528 = vmatpush2.bf16.msra.mxu0 0
      %529 = vmatprep.subr.bf16.mxu0 0
      %530 = vmatpush2.bf16.msra.mxu0 0
      %531 = vmatprep.subr.bf16.mxu0 0
      %532 = vmatpush2.bf16.msra.mxu0 0
      %533 = vmatprep.subr.bf16.mxu0 0
      %534 = vmatpush2.bf16.msra.mxu0 0
      %535 = vmatprep.subr.bf16.mxu0 0
      %536 = vmatpush2.bf16.msra.mxu0 0
      %537 = vmatprep.subr.bf16.mxu0 0
      %538 = vmatpush2.bf16.msra.mxu0 0
      %539 = vmatprep.subr.bf16.mxu0 0
      %540 = vmatpush2.bf16.msra.mxu0 0
      %541 = vmatprep.mubr.bf16.mxu0 0
      %542 = vmatmul.mubr.bf16.gmra.mxu0 %v443
      %v543 = vpop.f32.mrf.mxu0
      %v544 = vadd.f32 0.0, %v543
      %v545 = vpop.f32.mrf.mxu0
      %v546 = vpop.f32.mrf.mxu0
      %v547 = vadd.f32 0.0, %v546
      %v548 = vpop.f32.mrf.mxu0
      %549 = vdwg.mxu0
      %v550 = vadd.f32 %v435, %v544
      %v551 = vadd.f32 %v438, %v547
      %552 = vst [vmem:[%s195] sm:$0xff] %v550
      %553 = vst [vmem:[%s195 + $0x8] sm:$0xff] %v551
      %v554 = vld [vmem:[%s4] sm:$0x1]
      %v555 = vadd.f32 %v550, %v551
      %v556 = vrot.slane %v555, 4
      %v557 = vadd.f32 %v555, %v556
      %v558 = vrot.slane %v557, 2
      %v559 = vadd.f32 %v557, %v558
      %v560 = vrot.slane %v559, 1
      %v561 = vadd.f32 %v559, %v560
      %v562 = vadd.f32 %v554, %v561
      %563 = vst [vmem:[%s4] sm:$0x1] %v562
      %v564 = vld [vmem:[%s4 + $0x1] sm:$0x1]
      %v565 = vmul.f32 %v550, %v550
      %v566 = vmul.f32 %v551, %v551
      %v567 = vadd.f32 %v565, %v566
      %v568 = vrot.slane %v567, 4
      %v569 = vadd.f32 %v567, %v568
      %v570 = vrot.slane %v569, 2
      %v571 = vadd.f32 %v569, %v570
      %v572 = vrot.slane %v571, 1
      %v573 = vadd.f32 %v571, %v572
      %v574 = vadd.f32 %v564, %v573
      %575 = vst [vmem:[%s4 + $0x1] sm:$0x1] %v574
      %p576 = scmp.lt.s32.totalorder %s16, 1
      %s577 = scalar_select %p576, %s16, 1
      %s578 = smul.addr %s577, 2
      %s579 = smul.addr %s578, 8
      %s580 = scalar_lea.vmem %s3, %s579
      // Predicated region
      $region37: #{double_conv.4} parent=31 // pred_check
        %p581 = pneg %p102
      $region38: #{double_conv.4} parent=31 // pred_check_branch
        %583 = sbr.rel (%p581) target = $region40
      $region39: #{double_conv.4} parent=31 // pred_region
        _
      $region40: #{double_conv.4} parent=31 // pred_fallthru
        _
      // Predicated region
      $region41: #{double_conv.4} parent=31 // pred_check
        %p584 = pneg %p123
      $region42: #{double_conv.4} parent=31 // pred_check_branch
        %586 = sbr.rel (%p584) target = $region44
      $region43: #{double_conv.4} parent=31 // pred_region
        _
      $region44: #{double_conv.4} parent=31 // pred_fallthru
        _
      // Predicated region
      $region45: #{double_conv.4} parent=31 // pred_check
        %p587 = pneg %p123
      $region46: #{double_conv.4} parent=31 // pred_check_branch
        %589 = sbr.rel (%p587) target = $region48
      $region47: #{double_conv.4} parent=31 // pred_region
        _
      $region48: #{double_conv.4} parent=31 // pred_fallthru
        _
    $region32: #{double_conv.4} parent=5 // pred_fallthru
      _
    %p590 = scmp.le.s32.totalorder 2, %s11
    // Predicated region
    $region49: #{double_conv.4} parent=5 // pred_check
      %p591 = pneg %p590
    $region50: #{double_conv.4} parent=5 // pred_check_branch
      %593 = sbr.rel (%p591) target = $region52
    $region51: #{double_conv.4} parent=5 // pred_region
      %s594 = ssub.s32 %s11, 2
      // Predicated region
      $region53: #{double_conv.4} parent=51 // pred_check
        %p595 = pneg %p108
      $region54: #{double_conv.4} parent=51 // pred_check_branch
        %597 = sbr.rel (%p595) target = $region56
      $region55: #{double_conv.4} parent=51 // pred_region
        %p598 = scmp.lt.s32.totalorder %s17, 1
        %s599 = scalar_select %p598, %s17, 1
        %s600 = smul.addr %s599, 2
        %s601 = smul.addr %s600, 8
        %s602 = scalar_lea.vmem %s3, %s601
      $region56: #{double_conv.4} parent=51 // pred_fallthru
        _
    $region52: #{double_conv.4} parent=5 // pred_fallthru
      _
  $region6: #{double_conv.4} parent=0 // loop_footer
    %s15 = sadd.s32 1, %s11
  $region7: #{double_conv.4} parent=0 // loop_footer_branch
    %10 = sbr.rel target = $region3
  $region8: #{double_conv.4} parent=0 // loop_exit
    _

// kernel: double_conv.5
$region0: #{double_conv.5}
  #allocation0 [shape = 'u32[]', space=smem, size = 0x4, offset = 0x4, fixed_abs, tag = 'smem constant byte address 0x4 - core index']
  #allocation1 [shape = 'u32[144,128]{1,0:T(1,128)}', space=vmem, size = 0x12000, scoped, tag = 'internal scratch']
  %s0 = inlined_call_operand.vmem [shape: f32[2,16,128], index: 0, kind: input, shape index: {}]
  %s1 = inlined_call_operand.vmem [shape: f32[2,128], index: 1, kind: input, shape index: {}]
  %s2 = inlined_call_operand.vmem [shape: f32[2,16,128], index: 2, kind: output, shape index: {}]
  %s3 = sld [smem:[#allocation0]]
  $region41: #{double_conv.5} parent=0
    _
  %s5 = ssub.s32 1, %s3
  %s6 = scalar_select 0, %s5, %s3
  loop: start=0, step=1, limit=4
  $region2: #{double_conv.5} parent=0 // loop_pre_header
    _
  $region3: #{double_conv.5} parent=0 // loop_header
    %s8 = sphi 0, %s12
    %p9 = scmp.ge.s32.totalorder %s8, 4
    %s18 = sphi 0, %s20
    %s21 = sphi 0, %s18
    %s22 = sphi 0, %s21
    %s38 = sphi 0, %s22
    %s42 = sphi 0, %s42
    %s44 = sphi 0, %s42
    %s45 = sphi 0, %s44
    %s59 = sphi 0, %s45
    %s65 = sphi 0, %s67
    %s68 = sphi 0, %s65
    %s69 = sphi 0, %s68
    %s85 = sphi 0, %s69
  $region4: #{double_conv.5} parent=0 // loop_header_branch
    %11 = sbr.rel (%p9) target = $region8
  $region5: #{double_conv.5} parent=0 // loop_body
    %s13 = ssub.s32 %s8, 1
    %s14 = ssub.s32 %s8, 2
    %s15 = sadd.s32 %s8, 1
    %s16 = ssub.s32 %s8, %s15
    %p17 = scmp.eq.s32.totalorder %s16, 0
    %s19 = sadd.s32 %s18, 1
    %s20 = scalar_select %p17, %s18, %s19
    %p23 = pneg %p17
    %p24 = scmp.eq.s32.totalorder %s8, 1
    %p25 = por %p23, %p24
    %p26 = scmp.ne.s32.totalorder %s18, %s21
    %p27 = scmp.eq.s32.totalorder %s8, 0
    %p28 = por %p26, %p27
    %p29 = scmp.ne.s32.totalorder %s18, %s21
    %p30 = scmp.eq.s32.totalorder %s13, 1
    %p31 = por %p29, %p30
    %p32 = scmp.ne.s32.totalorder %s21, %s22
    %p33 = scmp.eq.s32.totalorder %s13, 0
    %p34 = por %p32, %p33
    %p35 = scmp.ne.s32.totalorder %s21, %s22
    %p36 = scmp.eq.s32.totalorder %s14, 1
    %p37 = por %p35, %p36
    %p39 = scmp.ne.s32.totalorder %s22, %s38
    %p40 = scmp.eq.s32.totalorder %s14, 0
    %p41 = por %p39, %p40
    %s43 = sadd.s32 %s42, 1
    %p46 = scmp.eq.s32.totalorder %s8, 1
    %p47 = scmp.ne.s32.totalorder %s42, %s44
    %p48 = scmp.eq.s32.totalorder %s8, 0
    %p49 = por %p47, %p48
    %p50 = scmp.ne.s32.totalorder %s42, %s44
    %p51 = scmp.eq.s32.totalorder %s13, 1
    %p52 = por %p50, %p51
    %p53 = scmp.ne.s32.totalorder %s44, %s45
    %p54 = scmp.eq.s32.totalorder %s13, 0
    %p55 = por %p53, %p54
    %p56 = scmp.ne.s32.totalorder %s44, %s45
    %p57 = scmp.eq.s32.totalorder %s14, 1
    %p58 = por %p56, %p57
    %p60 = scmp.ne.s32.totalorder %s45, %s59
    %p61 = scmp.eq.s32.totalorder %s14, 0
    %p62 = por %p60, %p61
    %s63 = ssub.s32 %s8, %s15
    %p64 = scmp.eq.s32.totalorder %s63, 0
    %s66 = sadd.s32 %s65, 1
    %s67 = scalar_select %p64, %s65, %s66
    %p70 = pneg %p64
    %p71 = scmp.eq.s32.totalorder %s8, 1
    %p72 = por %p70, %p71
    %p73 = scmp.ne.s32.totalorder %s65, %s68
    %p74 = scmp.eq.s32.totalorder %s8, 0
    %p75 = por %p73, %p74
    %p76 = scmp.ne.s32.totalorder %s65, %s68
    %p77 = scmp.eq.s32.totalorder %s13, 1
    %p78 = por %p76, %p77
    %p79 = scmp.ne.s32.totalorder %s68, %s69
    %p80 = scmp.eq.s32.totalorder %s13, 0
    %p81 = por %p79, %p80
    %p82 = scmp.ne.s32.totalorder %s68, %s69
    %p83 = scmp.eq.s32.totalorder %s14, 1
    %p84 = por %p82, %p83
    %p86 = scmp.ne.s32.totalorder %s69, %s85
    %p87 = scmp.eq.s32.totalorder %s14, 0
    %p88 = por %p86, %p87
    %p89 = scmp.le.s32.totalorder 1, %s8
    %p90 = scmp.lt.s32.totalorder %s8, 3
    %p91 = pnand %p89, %p90
    %p92 = pneg %p91
    // Predicated region
    $region9: #{double_conv.5} parent=5 // pred_check
      _
    $region10: #{double_conv.5} parent=5 // pred_check_branch
      %94 = sbr.rel (%p91) target = $region12
    $region11: #{double_conv.5} parent=5 // pred_region
      %s95 = ssub.s32 %s8, 1
      // Predicated region
      $region13: #{double_conv.5} parent=11 // pred_check
        %p96 = pneg %p55
      $region14: #{double_conv.5} parent=11 // pred_check_branch
        %98 = sbr.rel (%p96) target = $region16
      $region15: #{double_conv.5} parent=11 // pred_region
        _
      $region16: #{double_conv.5} parent=11 // pred_fallthru
        _
    $region12: #{double_conv.5} parent=5 // pred_fallthru
      _
    %p99 = scmp.lt.s32.totalorder %s8, 2
    // Predicated region
    $region17: #{double_conv.5} parent=5 // pred_check
      %p100 = pneg %p99
    $region18: #{double_conv.5} parent=5 // pred_check_branch
      %102 = sbr.rel (%p100) target = $region20
    $region19: #{double_conv.5} parent=5 // pred_region
      // Predicated region
      $region21: #{double_conv.5} parent=19 // pred_check
        %p103 = pneg %p28
      $region22: #{double_conv.5} parent=19 // pred_check_branch
        %105 = sbr.rel (%p103) target = $region24
      $region23: #{double_conv.5} parent=19 // pred_region
        %p106 = scmp.lt.s32.totalorder %s8, 1
        %s107 = scalar_select %p106, %s8, 1
        %s108 = smul.addr %s107, 2
        %s109 = smul.addr %s108, 8
        %s110 = scalar_lea.vmem %s0, %s109
      $region24: #{double_conv.5} parent=19 // pred_fallthru
        _
    $region20: #{double_conv.5} parent=5 // pred_fallthru
      _
    %p111 = scmp.le.s32.totalorder 1, %s8
    %p112 = scmp.lt.s32.totalorder %s8, 3
    %p113 = pnand %p111, %p112
    %p114 = pneg %p113
    // Predicated region
    $region25: #{double_conv.5} parent=5 // pred_check
      _
    $region26: #{double_conv.5} parent=5 // pred_check_branch
      %116 = sbr.rel (%p113) target = $region28
    $region27: #{double_conv.5} parent=5 // pred_region
      %s117 = ssub.s32 %s8, 1
      %p118 = scmp.lt.s32.totalorder %s13, 1
      %s119 = scalar_select %p118, %s13, 1
      %s120 = smul.addr %s119, 2
      %s121 = smul.addr %s120, 8
      %s122 = scalar_lea.vmem %s0, %s121
      %p123 = pneg %p34
      %p124 = pneg %p31
      %p125 = pneg %p55
      %p126 = pneg %p52
      %p127 = pneg %p81
      %p128 = pneg %p78
      %p129 = scmp.lt.s32.totalorder %s13, 1
      %s130 = scalar_select %p129, %s13, 1
      %s131 = smul.addr %s130, 2
      %s132 = smul.addr %s131, 8
      %s133 = scalar_lea.vmem %s2, %s132
      %p134 = scmp.lt.s32.totalorder %s13, 1
      %s135 = scalar_select %p134, %s13, 1
      %s136 = smul.addr %s135, 2
      %s137 = smul.addr %s136, 8
      %s138 = scalar_lea.vmem %s0, %s137
      %p139 = scmp.lt.s32.totalorder %s13, 1
      %s140 = scalar_select %p139, %s13, 1
      %s141 = smul.addr %s140, 2
      %s142 = smul.addr %s141, 8
      %s143 = scalar_lea.vmem %s2, %s142
      %v144 = vld [vmem:[%s138] sm:$0xff]
      %v145 = vld [vmem:[%s138 + $0x8] sm:$0xff]
      %v146 = vld [vmem:[%s1] sm:$0x1]
      %v147 = vlaneseq
      %v148 = vshrl.u32 %v147, 7
      %v149 = vsub.s32 0, %v148
      %v150 = vrot.slane %v146, %v149
      %v151 = vmul.f32 %v144, %v150
      %v152 = vmul.f32 %v145, %v150
      %v153 = vld [vmem:[%s1 + $0x1] sm:$0x1]
      %v154 = vlaneseq
      %v155 = vshrl.u32 %v154, 7
      %v156 = vsub.s32 0, %v155
      %v157 = vrot.slane %v153, %v156
      %v158 = vadd.f32 %v151, %v157
      %v159 = vadd.f32 %v152, %v157
      %v160 = vmax.f32 %v158, 0.0
      %v161 = vmax.f32 %v159, 0.0
      %162 = vst [vmem:[%s143] sm:$0xff] %v160
      %163 = vst [vmem:[%s143 + $0x8] sm:$0xff] %v161
      %p164 = scmp.lt.s32.totalorder %s13, 1
      %s165 = scalar_select %p164, %s13, 1
      %s166 = smul.addr %s165, 2
      %s167 = smul.addr %s166, 8
      %s168 = scalar_lea.vmem %s2, %s167
      // Predicated region
      $region29: #{double_conv.5} parent=27 // pred_check
        %p169 = pneg %p78
      $region30: #{double_conv.5} parent=27 // pred_check_branch
        %171 = sbr.rel (%p169) target = $region32
      $region31: #{double_conv.5} parent=27 // pred_region
        _
      $region32: #{double_conv.5} parent=27 // pred_fallthru
        _
    $region28: #{double_conv.5} parent=5 // pred_fallthru
      _
    %p172 = scmp.le.s32.totalorder 2, %s8
    // Predicated region
    $region33: #{double_conv.5} parent=5 // pred_check
      %p173 = pneg %p172
    $region34: #{double_conv.5} parent=5 // pred_check_branch
      %175 = sbr.rel (%p173) target = $region36
    $region35: #{double_conv.5} parent=5 // pred_region
      %s176 = ssub.s32 %s8, 2
      // Predicated region
      $region37: #{double_conv.5} parent=35 // pred_check
        %p177 = pneg %p84
      $region38: #{double_conv.5} parent=35 // pred_check_branch
        %179 = sbr.rel (%p177) target = $region40
      $region39: #{double_conv.5} parent=35 // pred_region
        %p180 = scmp.lt.s32.totalorder %s14, 1
        %s181 = scalar_select %p180, %s14, 1
        %s182 = smul.addr %s181, 2
        %s183 = smul.addr %s182, 8
        %s184 = scalar_lea.vmem %s2, %s183
      $region40: #{double_conv.5} parent=35 // pred_fallthru
        _
    $region36: #{double_conv.5} parent=5 // pred_fallthru
      _
  $region6: #{double_conv.5} parent=0 // loop_footer
    %s12 = sadd.s32 1, %s8
  $region7: #{double_conv.5} parent=0 // loop_footer_branch
    %7 = sbr.rel target = $region3
  $region8: #{double_conv.5} parent=0 // loop_exit
    _

</llo_original>
